<compile_context>
chip_gen: v5e
topology: v5e:2x2
jax: 0.10.0
libtpu: 0.0.40
codegen_flags: <defaults>
</compile_context>

<pallas_src>
import functools

import jax
import jax.numpy as jnp
from jax.experimental import pallas as pl
from jax.experimental.pallas import tpu as pltpu

NUM_HEADS = 4
EMBED_DIM = 32          # in_channels == out_channels == embed_dim
EDGE_DIM = 8
BN_EPS = 1e-5
NEG_SLOPE = 0.2         # PyG GATv2Conv default negative_slope
NEG_BIG = -1e30
SCORE_BLOCK_ELEMS = 8192            # DT*ST cap -> score temp DT*ST*128*4B <= 4 MiB
VMEM_LIMIT_BYTES = 40 * 1024 * 1024  # > v5e 16 MiB scoped default, < v7x 64 MiB physical


def _pick_tiles(n):
    """(dst_tile, src_chunk): aligned, divides n, bounded score block, and (when
    possible) >= 2 dst grid steps so the 'parallel' axis feeds both v7x TensorCores."""
    if n <= 256:
        st = n                                    # full src extent, no chunking
    elif n % 256 == 0:
        st = 256
    elif n % 128 == 0:
        st = 128
    else:
        st = n                                    # adj lane constraint: 128 | st or st == n
    budget = max(8, SCORE_BLOCK_ELEMS // st)
    cands = [t for t in range(min(budget, n), 0, -1) if t % 8 == 0 and n % t == 0]
    if not cands:
        return n, st
    for t in cands:
        if n // t >= 2:
            return t, st
    return cands[0], st


def proj_kernel(x_ref, w_ref, b_ref, xl_ref, xr_ref, *, hc):
    """Fused lin_l / lin_r projection: one bf16 MXU pass over [F, 2*H*C] (256 lanes)."""
    x = x_ref[...].astype(jnp.bfloat16)
    w = w_ref[...].astype(jnp.bfloat16)
    xlr = jnp.dot(x, w, preferred_element_type=jnp.float32) + b_ref[...]   # [N, 2*HC]
    xl_ref[...] = xlr[:, :hc]      # source side (x_j)
    xr_ref[...] = xlr[:, hc:]      # target side (x_i)


def gat_attn_kernel(xr_ref, xl_ref, e_ref, adj_ref, att_ref, out_ref,
                    m_s, l_s, acc_s, *, num_heads, out_channels):
    """Per (dst tile, src chunk) grid step: GATv2 scores, flash-style streaming softmax,
    bf16 MXU aggregation; writes a lane-dense [DT, H*C] per-head result on the last chunk."""
    H, C = num_heads, out_channels
    HC = H * C
    DT = xr_ref.shape[0]
    s_idx = pl.program_id(1)

    @pl.when(s_idx == 0)
    def _():
        m_s[...] = jnp.full(m_s.shape, NEG_BIG, jnp.float32)
        l_s[...] = jnp.zeros(l_s.shape, jnp.float32)
        acc_s[...] = jnp.zeros(acc_s.shape, jnp.float32)

    xr = xr_ref[...]                               # [DT, HC] f32
    xl = xl_ref[...]                               # [ST, HC] f32
    adj = adj_ref[...]                             # [DT, ST] f32 (1.0 where edge src->dst)
    att = att_ref[...]                             # [1, HC]

    # Head-vectorized GATv2 score + LeakyReLU + att-weighting at full 128-lane width.
    s = xr[:, None, :] + xl[None, :, :] + e_ref[...].astype(jnp.float32)   # [DT, ST, HC]
    s = jnp.where(s >= 0, s, NEG_SLOPE * s)
    s = s * att[None]

    # Per-head masked logits, heads stacked on sublanes: [H*DT, ST].
    neg = jnp.float32(NEG_BIG)
    logits = jnp.concatenate(
        [jnp.where(adj > 0, jnp.sum(s[:, :, h * C:(h + 1) * C], axis=-1), neg)
         for h in range(H)], axis=0)

    # Streaming (flash-style) softmax accumulation across src chunks.
    m_prev = m_s[...]
    m_new = jnp.maximum(m_prev, jnp.max(logits, axis=1, keepdims=True))
    corr = jnp.exp(m_prev - m_new)
    p = jnp.where(logits > jnp.float32(0.5 * NEG_BIG), jnp.exp(logits - m_new), 0.0)
    l_s[...] = corr * l_s[...] + jnp.sum(p, axis=1, keepdims=True)
    acc_s[...] = corr * acc_s[...] + jnp.dot(
        p.astype(jnp.bfloat16), xl.astype(jnp.bfloat16),
        preferred_element_type=jnp.float32)        # [H*DT, HC]
    m_s[...] = m_new

    @pl.when(s_idx == pl.num_programs(1) - 1)
    def _():
        inv_l = pl.reciprocal(jnp.maximum(l_s[...], jnp.float32(1e-20)), approx=True)
        res = acc_s[...] * inv_l                   # [H*DT, HC]; rows with no in-edges -> 0
        # Select the matching head C-block per head -> lane-dense [DT, HC] output.
        lane = jax.lax.broadcasted_iota(jnp.int32, (DT, HC), 1)
        out = jnp.zeros((DT, HC), jnp.float32)
        for h in range(H):
            blk = res[h * DT:(h + 1) * DT, :]
            out = out + jnp.where((lane >= h * C) & (lane < (h + 1) * C), blk, 0.0)
        out_ref[...] = out


def mean_bn_relu_kernel(xh_ref, bias_ref, gamma_ref, beta_ref, out_ref, *, num_heads, out_channels):
    """Head mean (concat=False) + conv bias, then BatchNorm1d with training-mode batch
    statistics (biased var) over all nodes, then ReLU."""
    H, C = num_heads, out_channels
    xh = xh_ref[...]                               # [N, H*C] f32
    acc = xh[:, 0:C]
    for h in range(1, H):
        acc = acc + xh[:, h * C:(h + 1) * C]
    x = acc * jnp.float32(1.0 / H) + bias_ref[...]
    mu = jnp.mean(x, axis=0, keepdims=True)
    var = jnp.mean((x - mu) ** 2, axis=0, keepdims=True)
    y = (x - mu) * jax.lax.rsqrt(var + jnp.float32(BN_EPS)) * gamma_ref[...] + beta_ref[...]
    out_ref[...] = jnp.maximum(y, 0.0).astype(out_ref.dtype)


def gatv2_layer(x, edge_index, edge_attr, params):
    """x: [N, F] f32, edge_index: [2, E_n] i32 (row0=src, row1=dst), edge_attr: [E_n, edge_dim]."""
    N, _ = x.shape
    H, C = NUM_HEADS, EMBED_DIM
    HC = H * C
    src, dst = edge_index[0], edge_index[1]

    # ---------- JAX glue: fuse weights, pre-project + densify edge features ----------
    w_cat = jnp.concatenate([params["W_l"], params["W_r"]], axis=1)      # [F, 2*HC]
    b_cat = jnp.concatenate([params["b_l"], params["b_r"]], axis=1)      # [1, 2*HC]

    # lin_edge applied on the sparse edge list, then densified per (dst, src) in bf16
    # (the densified stream dominates HBM traffic; bf16 halves it).
    # NOTE: duplicate (src, dst) edges collapse (last write wins).
    edge_proj = jnp.dot(edge_attr.astype(jnp.float32), params["W_e"])    # [E_n, HC]
    edge_dense = jnp.zeros((N, N, HC), jnp.bfloat16).at[dst, src].set(edge_proj.astype(jnp.bfloat16))
    adj = jnp.zeros((N, N), jnp.float32).at[dst, src].set(1.0)
    att_flat = params["att"].reshape(1, HC).astype(jnp.float32)

    vmem = pl.BlockSpec(memory_space=pltpu.MemorySpace.VMEM)

    # ---------- 1) fused projection (single block, bf16 MXU) ----------
    xl, xr = pl.pallas_call(
        functools.partial(proj_kernel, hc=HC),
        out_shape=(jax.ShapeDtypeStruct((N, HC), jnp.float32),
                   jax.ShapeDtypeStruct((N, HC), jnp.float32)),
        in_specs=[vmem, vmem, vmem],
        out_specs=(vmem, vmem),
    )(x, w_cat, b_cat)

    # ---------- 2) attention + aggregation: grid = (dst tiles [parallel], src chunks) ----------
    DT, ST = _pick_tiles(N)
    n_d, n_s = N // DT, N // ST
    out_heads = pl.pallas_call(
        functools.partial(gat_attn_kernel, num_heads=H, out_channels=C),
        out_shape=jax.ShapeDtypeStruct((N, HC), jnp.float32),
        grid_spec=pltpu.PrefetchScalarGridSpec(
            num_scalar_prefetch=0,
            grid=(n_d, n_s),
            in_specs=[
                pl.BlockSpec((DT, HC), lambda d, s: (d, 0)),           # xr  (dst tile)
                pl.BlockSpec((ST, HC), lambda d, s: (s, 0)),           # xl  (src chunk)
                pl.BlockSpec((DT, ST, HC), lambda d, s: (d, s, 0)),    # edge_dense (bf16)
                pl.BlockSpec((DT, ST), lambda d, s: (d, s)),           # adj
                pl.BlockSpec((1, HC), lambda d, s: (0, 0)),            # att (flattened)
            ],
            out_specs=pl.BlockSpec((DT, HC), lambda d, s: (d, 0)),     # per-head output (128 lanes)
            scratch_shapes=[
                pltpu.VMEM((H * DT, 1), jnp.float32),                  # running max
                pltpu.VMEM((H * DT, 1), jnp.float32),                  # running denom
                pltpu.VMEM((H * DT, HC), jnp.float32),                 # running numerator
            ]),
        compiler_params=pltpu.CompilerParams(
            dimension_semantics=("parallel", "arbitrary"),
            vmem_limit_bytes=VMEM_LIMIT_BYTES),
    )(xr, xl, edge_dense, adj, att_flat)

    # ---------- 3) head mean + bias + BatchNorm1d (batch stats over all N) + ReLU ----------
    out = pl.pallas_call(
        functools.partial(mean_bn_relu_kernel, num_heads=H, out_channels=C),
        out_shape=jax.ShapeDtypeStruct((N, C), jnp.float32),
        in_specs=[vmem, vmem, vmem, vmem],
        out_specs=vmem,
    )(out_heads, params["bias"], params["gamma"], params["beta"])
    return out


def init_params(key):
    H, C, F, E = NUM_HEADS, EMBED_DIM, EMBED_DIM, EDGE_DIM
    ks = jax.random.split(key, 6)

    def glorot(k, shape):
        fan_in, fan_out = shape[0], shape[1]
        lim = jnp.sqrt(6.0 / (fan_in + fan_out))
        return jax.random.uniform(k, shape, jnp.float32, -lim, lim)

    return {
        "W_l": glorot(ks[0], (F, H * C)),
        "b_l": jnp.zeros((1, H * C), jnp.float32),
        "W_r": glorot(ks[1], (F, H * C)),
        "b_r": jnp.zeros((1, H * C), jnp.float32),
        "W_e": glorot(ks[2], (E, H * C)),
        "att": glorot(ks[3], (H, C)),
        "bias": jnp.zeros((1, C), jnp.float32),
        "gamma": jnp.ones((1, C), jnp.float32),
        "beta": jnp.zeros((1, C), jnp.float32),
    }


if __name__ == "__main__":
    key = jax.random.PRNGKey(0)
    k_x, k_e, k_p = jax.random.split(key, 3)

    N = 16
    # Node features [N, embed_dim]
    x = jax.random.normal(k_x, (N, EMBED_DIM), jnp.float32)

    # Deterministic ring-ish graph: i -> (i+1)%N and i -> (i+2)%N  (32 edges, no duplicates)
    src = jnp.concatenate([jnp.arange(N), jnp.arange(N)]).astype(jnp.int32)
    dst = jnp.concatenate([(jnp.arange(N) + 1) % N, (jnp.arange(N) + 2) % N]).astype(jnp.int32)
    edge_index = jnp.stack([src, dst], axis=0)                      # [2, 32]
    edge_attr = jax.random.normal(k_e, (edge_index.shape[1], EDGE_DIM), jnp.float32)

    params = init_params(k_p)

    out = jax.jit(gatv2_layer)(x, edge_index, edge_attr, params)
    jax.block_until_ready(out)
    assert out.shape == (N, EMBED_DIM) and out.dtype == jnp.float32
    print("KERNEL_OK")
</pallas_src>

<mosaic_0001>
module attributes {stable_mosaic.version = 11 : i64} {
  func.func @proj_kernel(%arg0: memref<16x32xf32, #tpu.memory_space<vmem>>, %arg1: memref<32x256xf32, #tpu.memory_space<vmem>>, %arg2: memref<1x256xf32, #tpu.memory_space<vmem>>, %arg3: memref<16x128xf32, #tpu.memory_space<vmem>>, %arg4: memref<16x128xf32, #tpu.memory_space<vmem>>) attributes {dimension_semantics = [], scalar_prefetch = 0 : i64, scratch_operands = 0 : i64, tpu.core_type = #tpu.core_type<tc>} {
    %c0 = arith.constant 0 : index
    %c0_0 = arith.constant 0 : index
    %0 = vector.load %arg0[%c0, %c0_0] : memref<16x32xf32, #tpu.memory_space<vmem>>, vector<16x32xf32>
    %1 = arith.truncf %0 : vector<16x32xf32> to vector<16x32xbf16>
    %c0_1 = arith.constant 0 : index
    %c0_2 = arith.constant 0 : index
    %2 = vector.load %arg1[%c0_1, %c0_2] : memref<32x256xf32, #tpu.memory_space<vmem>>, vector<32x256xf32>
    %3 = arith.truncf %2 : vector<32x256xf32> to vector<32x256xbf16>
    %cst = arith.constant dense<0.000000e+00> : vector<16x256xf32>
    %4 = tpu.matmul %1, %3, %cst {dimension_numbers = #tpu.dot_dimension_numbers<[1], [0], [0], [1], [0, 0, 1, 1], [], []>} : vector<16x32xbf16>, vector<32x256xbf16>, vector<16x256xf32> -> vector<16x256xf32>
    %c0_3 = arith.constant 0 : index
    %c0_4 = arith.constant 0 : index
    %5 = vector.load %arg2[%c0_3, %c0_4] : memref<1x256xf32, #tpu.memory_space<vmem>>, vector<1x256xf32>
    %6 = vector.broadcast %5 : vector<1x256xf32> to vector<16x256xf32>
    %7 = arith.addf %4, %6 : vector<16x256xf32>
    %8 = vector.extract_strided_slice %7 {offsets = [0, 0], sizes = [16, 128], strides = [1, 1]} : vector<16x256xf32> to vector<16x128xf32>
    %c0_5 = arith.constant 0 : index
    %c0_6 = arith.constant 0 : index
    %9 = vector.load %arg3[%c0_5, %c0_6] : memref<16x128xf32, #tpu.memory_space<vmem>>, vector<16x128xf32>
    tpu.vector_store %arg3[%c0_5, %c0_6], %8 {strides = array<i32>} : memref<16x128xf32, #tpu.memory_space<vmem>>, vector<16x128xf32>,
    %10 = vector.extract_strided_slice %7 {offsets = [0, 128], sizes = [16, 128], strides = [1, 1]} : vector<16x256xf32> to vector<16x128xf32>
    %c0_7 = arith.constant 0 : index
    %c0_8 = arith.constant 0 : index
    %11 = vector.load %arg4[%c0_7, %c0_8] : memref<16x128xf32, #tpu.memory_space<vmem>>, vector<16x128xf32>
    tpu.vector_store %arg4[%c0_7, %c0_8], %10 {strides = array<i32>} : memref<16x128xf32, #tpu.memory_space<vmem>>, vector<16x128xf32>,
    return
  }
}

module attributes {stable_mosaic.version = 11 : i64} {
  func.func @gat_attn_kernel(%arg0: i32, %arg1: i32, %arg2: memref<8x128xf32, #tpu.memory_space<vmem>>, %arg3: memref<16x128xf32, #tpu.memory_space<vmem>>, %arg4: memref<8x16x128xbf16, #tpu.memory_space<vmem>>, %arg5: memref<8x16xf32, #tpu.memory_space<vmem>>, %arg6: memref<1x128xf32, #tpu.memory_space<vmem>>, %arg7: memref<8x128xf32, #tpu.memory_space<vmem>>, %arg8: memref<32x1xf32, #tpu.memory_space<vmem>>, %arg9: memref<32x1xf32, #tpu.memory_space<vmem>>, %arg10: memref<32x128xf32, #tpu.memory_space<vmem>>) attributes {dimension_semantics = [#tpu.dimension_semantics<parallel>, #tpu.dimension_semantics<arbitrary>], iteration_bounds = array<i64: 2, 1>, scalar_prefetch = 0 : i64, scratch_operands = 3 : i64, tpu.core_type = #tpu.core_type<tc>, window_params = [{transform_indices = @transform_0, window_bounds = array<i64: 8, 128>}, {transform_indices = @transform_1, window_bounds = array<i64: 16, 128>}, {transform_indices = @transform_2, window_bounds = array<i64: 8, 16, 128>}, {transform_indices = @transform_3, window_bounds = array<i64: 8, 16>}, {pipeline_mode = #tpu.pipeline_mode<synchronous>, transform_indices = @transform_4, window_bounds = array<i64: 1, 128>}, {transform_indices = @transform_5, window_bounds = array<i64: 8, 128>}]} {
    %c0_i32 = arith.constant 0 : i32
    %0 = arith.cmpi eq, %arg1, %c0_i32 : i32
    %1 = arith.extui %0 : i1 to i32
    %c0_i32_0 = arith.constant 0 : i32
    %2 = arith.cmpi ne, %1, %c0_i32_0 : i32
    scf.if %2 {
      %cst_43 = arith.constant -1.000000e+30 : f32
      %79 = vector.broadcast %cst_43 : f32 to vector<32x1xf32>
      %c0_44 = arith.constant 0 : index
      %c0_45 = arith.constant 0 : index
      %80 = vector.load %arg8[%c0_44, %c0_45] : memref<32x1xf32, #tpu.memory_space<vmem>>, vector<32x1xf32>
      tpu.vector_store %arg8[%c0_44, %c0_45], %79 {strides = array<i32>} : memref<32x1xf32, #tpu.memory_space<vmem>>, vector<32x1xf32>,
      %cst_46 = arith.constant 0.000000e+00 : f32
      %81 = vector.broadcast %cst_46 : f32 to vector<32x1xf32>
      %c0_47 = arith.constant 0 : index
      %c0_48 = arith.constant 0 : index
      %82 = vector.load %arg9[%c0_47, %c0_48] : memref<32x1xf32, #tpu.memory_space<vmem>>, vector<32x1xf32>
      tpu.vector_store %arg9[%c0_47, %c0_48], %81 {strides = array<i32>} : memref<32x1xf32, #tpu.memory_space<vmem>>, vector<32x1xf32>,
      %cst_49 = arith.constant 0.000000e+00 : f32
      %83 = vector.broadcast %cst_49 : f32 to vector<32x128xf32>
      %c0_50 = arith.constant 0 : index
      %c0_51 = arith.constant 0 : index
      %84 = vector.load %arg10[%c0_50, %c0_51] : memref<32x128xf32, #tpu.memory_space<vmem>>, vector<32x128xf32>
      tpu.vector_store %arg10[%c0_50, %c0_51], %83 {strides = array<i32>} : memref<32x128xf32, #tpu.memory_space<vmem>>, vector<32x128xf32>,
    } else {
    }
    %c0 = arith.constant 0 : index
    %c0_1 = arith.constant 0 : index
    %3 = vector.load %arg2[%c0, %c0_1] : memref<8x128xf32, #tpu.memory_space<vmem>>, vector<8x128xf32>
    %c0_2 = arith.constant 0 : index
    %c0_3 = arith.constant 0 : index
    %4 = vector.load %arg3[%c0_2, %c0_3] : memref<16x128xf32, #tpu.memory_space<vmem>>, vector<16x128xf32>
    %c0_4 = arith.constant 0 : index
    %c0_5 = arith.constant 0 : index
    %5 = vector.load %arg5[%c0_4, %c0_5] : memref<8x16xf32, #tpu.memory_space<vmem>>, vector<8x16xf32>
    %c0_6 = arith.constant 0 : index
    %c0_7 = arith.constant 0 : index
    %6 = vector.load %arg6[%c0_6, %c0_7] : memref<1x128xf32, #tpu.memory_space<vmem>>, vector<1x128xf32>
    %7 = vector.shape_cast %3 : vector<8x128xf32> to vector<8x1x128xf32>
    %8 = vector.shape_cast %4 : vector<16x128xf32> to vector<1x16x128xf32>
    %9 = vector.broadcast %7 : vector<8x1x128xf32> to vector<8x16x128xf32>
    %10 = vector.broadcast %8 : vector<1x16x128xf32> to vector<8x16x128xf32>
    %11 = arith.addf %9, %10 : vector<8x16x128xf32>
    %c0_8 = arith.constant 0 : index
    %c0_9 = arith.constant 0 : index
    %c0_10 = arith.constant 0 : index
    %12 = vector.load %arg4[%c0_8, %c0_9, %c0_10] : memref<8x16x128xbf16, #tpu.memory_space<vmem>>, vector<8x16x128xbf16>
    %13 = arith.extf %12 : vector<8x16x128xbf16> to vector<8x16x128xf32>
    %14 = arith.addf %11, %13 : vector<8x16x128xf32>
    %cst = arith.constant 0.000000e+00 : f32
    %15 = vector.broadcast %cst : f32 to vector<8x16x128xf32>
    %16 = arith.cmpf oge, %14, %15 : vector<8x16x128xf32>
    %cst_11 = arith.constant 2.000000e-01 : f32
    %17 = vector.broadcast %cst_11 : f32 to vector<8x16x128xf32>
    %18 = arith.mulf %17, %14 : vector<8x16x128xf32>
    %19 = arith.select %16, %14, %18 : vector<8x16x128xi1>, vector<8x16x128xf32>
    %20 = vector.shape_cast %6 : vector<1x128xf32> to vector<1x1x128xf32>
    %21 = vector.broadcast %20 : vector<1x1x128xf32> to vector<8x16x128xf32>
    %22 = arith.mulf %19, %21 : vector<8x16x128xf32>
    %cst_12 = arith.constant 0.000000e+00 : f32
    %23 = vector.broadcast %cst_12 : f32 to vector<8x16xf32>
    %24 = arith.cmpf ogt, %5, %23 : vector<8x16xf32>
    %25 = vector.extract_strided_slice %22 {offsets = [0, 0, 0], sizes = [8, 16, 32], strides = [1, 1, 1]} : vector<8x16x128xf32> to vector<8x16x32xf32>
    %cst_13 = arith.constant dense<0.000000e+00> : vector<8x16xf32>
    %26 = vector.multi_reduction <add>, %25, %cst_13 [2] : vector<8x16x32xf32> to vector<8x16xf32>
    %cst_14 = arith.constant -1.000000e+30 : f32
    %27 = vector.broadcast %cst_14 : f32 to vector<8x16xf32>
    %28 = arith.select %24, %26, %27 : vector<8x16xi1>, vector<8x16xf32>
    %cst_15 = arith.constant 0.000000e+00 : f32
    %29 = vector.broadcast %cst_15 : f32 to vector<8x16xf32>
    %30 = arith.cmpf ogt, %5, %29 : vector<8x16xf32>
    %31 = vector.extract_strided_slice %22 {offsets = [0, 0, 32], sizes = [8, 16, 32], strides = [1, 1, 1]} : vector<8x16x128xf32> to vector<8x16x32xf32>
    %cst_16 = arith.constant dense<0.000000e+00> : vector<8x16xf32>
    %32 = vector.multi_reduction <add>, %31, %cst_16 [2] : vector<8x16x32xf32> to vector<8x16xf32>
    %cst_17 = arith.constant -1.000000e+30 : f32
    %33 = vector.broadcast %cst_17 : f32 to vector<8x16xf32>
    %34 = arith.select %30, %32, %33 : vector<8x16xi1>, vector<8x16xf32>
    %cst_18 = arith.constant 0.000000e+00 : f32
    %35 = vector.broadcast %cst_18 : f32 to vector<8x16xf32>
    %36 = arith.cmpf ogt, %5, %35 : vector<8x16xf32>
    %37 = vector.extract_strided_slice %22 {offsets = [0, 0, 64], sizes = [8, 16, 32], strides = [1, 1, 1]} : vector<8x16x128xf32> to vector<8x16x32xf32>
    %cst_19 = arith.constant dense<0.000000e+00> : vector<8x16xf32>
    %38 = vector.multi_reduction <add>, %37, %cst_19 [2] : vector<8x16x32xf32> to vector<8x16xf32>
    %cst_20 = arith.constant -1.000000e+30 : f32
    %39 = vector.broadcast %cst_20 : f32 to vector<8x16xf32>
    %40 = arith.select %36, %38, %39 : vector<8x16xi1>, vector<8x16xf32>
    %cst_21 = arith.constant 0.000000e+00 : f32
    %41 = vector.broadcast %cst_21 : f32 to vector<8x16xf32>
    %42 = arith.cmpf ogt, %5, %41 : vector<8x16xf32>
    %43 = vector.extract_strided_slice %22 {offsets = [0, 0, 96], sizes = [8, 16, 32], strides = [1, 1, 1]} : vector<8x16x128xf32> to vector<8x16x32xf32>
    %cst_22 = arith.constant dense<0.000000e+00> : vector<8x16xf32>
    %44 = vector.multi_reduction <add>, %43, %cst_22 [2] : vector<8x16x32xf32> to vector<8x16xf32>
    %cst_23 = arith.constant -1.000000e+30 : f32
    %45 = vector.broadcast %cst_23 : f32 to vector<8x16xf32>
    %46 = arith.select %42, %44, %45 : vector<8x16xi1>, vector<8x16xf32>
    %47 = tpu.concatenate %28, %34, %40, %46 in 0 : vector<8x16xf32>, vector<8x16xf32>, vector<8x16xf32>, vector<8x16xf32> -> vector<32x16xf32>
    %c0_24 = arith.constant 0 : index
    %c0_25 = arith.constant 0 : index
    %48 = vector.load %arg8[%c0_24, %c0_25] : memref<32x1xf32, #tpu.memory_space<vmem>>, vector<32x1xf32>
    %cst_26 = arith.constant dense<0xFF800000> : vector<32xf32>
    %49 = vector.multi_reduction <maximumf>, %47, %cst_26 [1] : vector<32x16xf32> to vector<32xf32>
    %50 = vector.shape_cast %49 : vector<32xf32> to vector<32x1xf32>
    %51 = arith.maximumf %48, %50 : vector<32x1xf32>
    %52 = arith.subf %48, %51 : vector<32x1xf32>
    %53 = math.exp %52 : vector<32x1xf32>
    %cst_27 = arith.constant -5.000000e+29 : f32
    %54 = vector.broadcast %cst_27 : f32 to vector<32x16xf32>
    %55 = arith.cmpf ogt, %47, %54 : vector<32x16xf32>
    %56 = vector.broadcast %51 : vector<32x1xf32> to vector<32x16xf32>
    %57 = arith.subf %47, %56 : vector<32x16xf32>
    %58 = math.exp %57 : vector<32x16xf32>
    %cst_28 = arith.constant 0.000000e+00 : f32
    %59 = vector.broadcast %cst_28 : f32 to vector<32x16xf32>
    %60 = arith.select %55, %58, %59 : vector<32x16xi1>, vector<32x16xf32>
    %c0_29 = arith.constant 0 : index
    %c0_30 = arith.constant 0 : index
    %61 = vector.load %arg9[%c0_29, %c0_30] : memref<32x1xf32, #tpu.memory_space<vmem>>, vector<32x1xf32>
    %62 = arith.mulf %53, %61 : vector<32x1xf32>
    %cst_31 = arith.constant dense<0.000000e+00> : vector<32xf32>
    %63 = vector.multi_reduction <add>, %60, %cst_31 [1] : vector<32x16xf32> to vector<32xf32>
    %64 = vector.shape_cast %63 : vector<32xf32> to vector<32x1xf32>
    %65 = arith.addf %62, %64 : vector<32x1xf32>
    %c0_32 = arith.constant 0 : index
    %c0_33 = arith.constant 0 : index
    %66 = vector.load %arg9[%c0_32, %c0_33] : memref<32x1xf32, #tpu.memory_space<vmem>>, vector<32x1xf32>
    tpu.vector_store %arg9[%c0_32, %c0_33], %65 {strides = array<i32>} : memref<32x1xf32, #tpu.memory_space<vmem>>, vector<32x1xf32>,
    %c0_34 = arith.constant 0 : index
    %c0_35 = arith.constant 0 : index
    %67 = vector.load %arg10[%c0_34, %c0_35] : memref<32x128xf32, #tpu.memory_space<vmem>>, vector<32x128xf32>
    %68 = vector.broadcast %53 : vector<32x1xf32> to vector<32x128xf32>
    %69 = arith.mulf %68, %67 : vector<32x128xf32>
    %70 = arith.truncf %60 : vector<32x16xf32> to vector<32x16xbf16>
    %71 = arith.truncf %4 : vector<16x128xf32> to vector<16x128xbf16>
    %cst_36 = arith.constant dense<0.000000e+00> : vector<32x128xf32>
    %72 = tpu.matmul %70, %71, %cst_36 {dimension_numbers = #tpu.dot_dimension_numbers<[1], [0], [0], [1], [0, 0, 1, 1], [], []>} : vector<32x16xbf16>, vector<16x128xbf16>, vector<32x128xf32> -> vector<32x128xf32>
    %73 = arith.addf %69, %72 : vector<32x128xf32>
    %c0_37 = arith.constant 0 : index
    %c0_38 = arith.constant 0 : index
    %74 = vector.load %arg10[%c0_37, %c0_38] : memref<32x128xf32, #tpu.memory_space<vmem>>, vector<32x128xf32>
    tpu.vector_store %arg10[%c0_37, %c0_38], %73 {strides = array<i32>} : memref<32x128xf32, #tpu.memory_space<vmem>>, vector<32x128xf32>,
    %c0_39 = arith.constant 0 : index
    %c0_40 = arith.constant 0 : index
    %75 = vector.load %arg8[%c0_39, %c0_40] : memref<32x1xf32, #tpu.memory_space<vmem>>, vector<32x1xf32>
    tpu.vector_store %arg8[%c0_39, %c0_40], %51 {strides = array<i32>} : memref<32x1xf32, #tpu.memory_space<vmem>>, vector<32x1xf32>,
    %c0_i32_41 = arith.constant 0 : i32
    %76 = arith.cmpi eq, %arg1, %c0_i32_41 : i32
    %77 = arith.extui %76 : i1 to i32
    %c0_i32_42 = arith.constant 0 : i32
    %78 = arith.cmpi ne, %77, %c0_i32_42 : i32
    scf.if %78 {
      %c0_43 = arith.constant 0 : index
      %c0_44 = arith.constant 0 : index
      %79 = vector.load %arg9[%c0_43, %c0_44] : memref<32x1xf32, #tpu.memory_space<vmem>>, vector<32x1xf32>
      %cst_45 = arith.constant 9.99999968E-21 : f32
      %80 = vector.broadcast %cst_45 : f32 to vector<32x1xf32>
      %81 = arith.maximumf %79, %80 : vector<32x1xf32>
      %82 = tpu.reciprocal %81 {approx = true} : vector<32x1xf32> -> vector<32x1xf32>
      %c0_46 = arith.constant 0 : index
      %c0_47 = arith.constant 0 : index
      %83 = vector.load %arg10[%c0_46, %c0_47] : memref<32x128xf32, #tpu.memory_space<vmem>>, vector<32x128xf32>
      %84 = vector.broadcast %82 : vector<32x1xf32> to vector<32x128xf32>
      %85 = arith.mulf %83, %84 : vector<32x128xf32>
      %86 = tpu.iota {dimensions = array<i32: 1>} : vector<8x128xi32>
      %cst_48 = arith.constant 0.000000e+00 : f32
      %87 = vector.broadcast %cst_48 : f32 to vector<8x128xf32>
      %88 = vector.extract_strided_slice %85 {offsets = [0, 0], sizes = [8, 128], strides = [1, 1]} : vector<32x128xf32> to vector<8x128xf32>
      %c0_i32_49 = arith.constant 0 : i32
      %89 = vector.broadcast %c0_i32_49 : i32 to vector<8x128xi32>
      %90 = arith.cmpi sge, %86, %89 : vector<8x128xi32>
      %c32_i32 = arith.constant 32 : i32
      %91 = vector.broadcast %c32_i32 : i32 to vector<8x128xi32>
      %92 = arith.cmpi slt, %86, %91 : vector<8x128xi32>
      %93 = arith.andi %90, %92 : vector<8x128xi1>
      %cst_50 = arith.constant 0.000000e+00 : f32
      %94 = vector.broadcast %cst_50 : f32 to vector<8x128xf32>
      %95 = arith.select %93, %88, %94 : vector<8x128xi1>, vector<8x128xf32>
      %96 = arith.addf %87, %95 : vector<8x128xf32>
      %97 = vector.extract_strided_slice %85 {offsets = [8, 0], sizes = [8, 128], strides = [1, 1]} : vector<32x128xf32> to vector<8x128xf32>
      %c32_i32_51 = arith.constant 32 : i32
      %98 = vector.broadcast %c32_i32_51 : i32 to vector<8x128xi32>
      %99 = arith.cmpi sge, %86, %98 : vector<8x128xi32>
      %c64_i32 = arith.constant 64 : i32
      %100 = vector.broadcast %c64_i32 : i32 to vector<8x128xi32>
      %101 = arith.cmpi slt, %86, %100 : vector<8x128xi32>
      %102 = arith.andi %99, %101 : vector<8x128xi1>
      %cst_52 = arith.constant 0.000000e+00 : f32
      %103 = vector.broadcast %cst_52 : f32 to vector<8x128xf32>
      %104 = arith.select %102, %97, %103 : vector<8x128xi1>, vector<8x128xf32>
      %105 = arith.addf %96, %104 : vector<8x128xf32>
      %106 = vector.extract_strided_slice %85 {offsets = [16, 0], sizes = [8, 128], strides = [1, 1]} : vector<32x128xf32> to vector<8x128xf32>
      %c64_i32_53 = arith.constant 64 : i32
      %107 = vector.broadcast %c64_i32_53 : i32 to vector<8x128xi32>
      %108 = arith.cmpi sge, %86, %107 : vector<8x128xi32>
      %c96_i32 = arith.constant 96 : i32
      %109 = vector.broadcast %c96_i32 : i32 to vector<8x128xi32>
      %110 = arith.cmpi slt, %86, %109 : vector<8x128xi32>
      %111 = arith.andi %108, %110 : vector<8x128xi1>
      %cst_54 = arith.constant 0.000000e+00 : f32
      %112 = vector.broadcast %cst_54 : f32 to vector<8x128xf32>
      %113 = arith.select %111, %106, %112 : vector<8x128xi1>, vector<8x128xf32>
      %114 = arith.addf %105, %113 : vector<8x128xf32>
      %115 = vector.extract_strided_slice %85 {offsets = [24, 0], sizes = [8, 128], strides = [1, 1]} : vector<32x128xf32> to vector<8x128xf32>
      %c96_i32_55 = arith.constant 96 : i32
      %116 = vector.broadcast %c96_i32_55 : i32 to vector<8x128xi32>
      %117 = arith.cmpi sge, %86, %116 : vector<8x128xi32>
      %c128_i32 = arith.constant 128 : i32
      %118 = vector.broadcast %c128_i32 : i32 to vector<8x128xi32>
      %119 = arith.cmpi slt, %86, %118 : vector<8x128xi32>
      %120 = arith.andi %117, %119 : vector<8x128xi1>
      %cst_56 = arith.constant 0.000000e+00 : f32
      %121 = vector.broadcast %cst_56 : f32 to vector<8x128xf32>
      %122 = arith.select %120, %115, %121 : vector<8x128xi1>, vector<8x128xf32>
      %123 = arith.addf %114, %122 : vector<8x128xf32>
      %c0_57 = arith.constant 0 : index
      %c0_58 = arith.constant 0 : index
      %124 = vector.load %arg7[%c0_57, %c0_58] : memref<8x128xf32, #tpu.memory_space<vmem>>, vector<8x128xf32>
      tpu.vector_store %arg7[%c0_57, %c0_58], %123 {strides = array<i32>} : memref<8x128xf32, #tpu.memory_space<vmem>>, vector<8x128xf32>,
    } else {
    }
    return
  }
  func.func @transform_0(%arg0: i32, %arg1: i32) -> (i32, i32) {
    %c0_i32 = arith.constant 0 : i32
    %c0_i32_0 = arith.constant 0 : i32
    return %arg0, %c0_i32 : i32, i32
  }
  func.func @transform_1(%arg0: i32, %arg1: i32) -> (i32, i32) {
    %c0_i32 = arith.constant 0 : i32
    %c0_i32_0 = arith.constant 0 : i32
    return %arg1, %c0_i32 : i32, i32
  }
  func.func @transform_2(%arg0: i32, %arg1: i32) -> (i32, i32, i32) {
    %c0_i32 = arith.constant 0 : i32
    %c0_i32_0 = arith.constant 0 : i32
    return %arg0, %arg1, %c0_i32 : i32, i32, i32
  }
  func.func @transform_3(%arg0: i32, %arg1: i32) -> (i32, i32) {
    %c0_i32 = arith.constant 0 : i32
    return %arg0, %arg1 : i32, i32
  }
  func.func @transform_4(%arg0: i32, %arg1: i32) -> (i32, i32) {
    %c0_i32 = arith.constant 0 : i32
    %c0_i32_0 = arith.constant 0 : i32
    %c0_i32_1 = arith.constant 0 : i32
    return %c0_i32, %c0_i32_0 : i32, i32
  }
  func.func @transform_5(%arg0: i32, %arg1: i32) -> (i32, i32) {
    %c0_i32 = arith.constant 0 : i32
    %c0_i32_0 = arith.constant 0 : i32
    return %arg0, %c0_i32 : i32, i32
  }
}

module attributes {stable_mosaic.version = 11 : i64} {
  func.func @mean_bn_relu_kernel(%arg0: memref<16x128xf32, #tpu.memory_space<vmem>>, %arg1: memref<1x32xf32, #tpu.memory_space<vmem>>, %arg2: memref<1x32xf32, #tpu.memory_space<vmem>>, %arg3: memref<1x32xf32, #tpu.memory_space<vmem>>, %arg4: memref<16x32xf32, #tpu.memory_space<vmem>>) attributes {dimension_semantics = [], scalar_prefetch = 0 : i64, scratch_operands = 0 : i64, tpu.core_type = #tpu.core_type<tc>} {
    %c0 = arith.constant 0 : index
    %c0_0 = arith.constant 0 : index
    %0 = vector.load %arg0[%c0, %c0_0] : memref<16x128xf32, #tpu.memory_space<vmem>>, vector<16x128xf32>
    %1 = vector.extract_strided_slice %0 {offsets = [0, 0], sizes = [16, 32], strides = [1, 1]} : vector<16x128xf32> to vector<16x32xf32>
    %2 = vector.extract_strided_slice %0 {offsets = [0, 32], sizes = [16, 32], strides = [1, 1]} : vector<16x128xf32> to vector<16x32xf32>
    %3 = arith.addf %1, %2 : vector<16x32xf32>
    %4 = vector.extract_strided_slice %0 {offsets = [0, 64], sizes = [16, 32], strides = [1, 1]} : vector<16x128xf32> to vector<16x32xf32>
    %5 = arith.addf %3, %4 : vector<16x32xf32>
    %6 = vector.extract_strided_slice %0 {offsets = [0, 96], sizes = [16, 32], strides = [1, 1]} : vector<16x128xf32> to vector<16x32xf32>
    %7 = arith.addf %5, %6 : vector<16x32xf32>
    %cst = arith.constant 2.500000e-01 : f32
    %8 = vector.broadcast %cst : f32 to vector<16x32xf32>
    %9 = arith.mulf %7, %8 : vector<16x32xf32>
    %c0_1 = arith.constant 0 : index
    %c0_2 = arith.constant 0 : index
    %10 = vector.load %arg1[%c0_1, %c0_2] : memref<1x32xf32, #tpu.memory_space<vmem>>, vector<1x32xf32>
    %11 = vector.broadcast %10 : vector<1x32xf32> to vector<16x32xf32>
    %12 = arith.addf %9, %11 : vector<16x32xf32>
    %cst_3 = arith.constant dense<0.000000e+00> : vector<32xf32>
    %13 = vector.multi_reduction <add>, %12, %cst_3 [0] : vector<16x32xf32> to vector<32xf32>
    %14 = vector.shape_cast %13 : vector<32xf32> to vector<1x32xf32>
    %cst_4 = arith.constant 1.600000e+01 : f32
    %15 = vector.broadcast %cst_4 : f32 to vector<1x32xf32>
    %16 = arith.divf %14, %15 : vector<1x32xf32>
    %17 = vector.broadcast %16 : vector<1x32xf32> to vector<16x32xf32>
    %18 = arith.subf %12, %17 : vector<16x32xf32>
    %19 = arith.mulf %18, %18 : vector<16x32xf32>
    %cst_5 = arith.constant dense<0.000000e+00> : vector<32xf32>
    %20 = vector.multi_reduction <add>, %19, %cst_5 [0] : vector<16x32xf32> to vector<32xf32>
    %21 = vector.shape_cast %20 : vector<32xf32> to vector<1x32xf32>
    %cst_6 = arith.constant 1.600000e+01 : f32
    %22 = vector.broadcast %cst_6 : f32 to vector<1x32xf32>
    %23 = arith.divf %21, %22 : vector<1x32xf32>
    %24 = vector.broadcast %16 : vector<1x32xf32> to vector<16x32xf32>
    %25 = arith.subf %12, %24 : vector<16x32xf32>
    %cst_7 = arith.constant 9.99999974E-6 : f32
    %26 = vector.broadcast %cst_7 : f32 to vector<1x32xf32>
    %27 = arith.addf %23, %26 : vector<1x32xf32>
    %28 = math.rsqrt %27 : vector<1x32xf32>
    %29 = vector.broadcast %28 : vector<1x32xf32> to vector<16x32xf32>
    %30 = arith.mulf %25, %29 : vector<16x32xf32>
    %c0_8 = arith.constant 0 : index
    %c0_9 = arith.constant 0 : index
    %31 = vector.load %arg2[%c0_8, %c0_9] : memref<1x32xf32, #tpu.memory_space<vmem>>, vector<1x32xf32>
    %32 = vector.broadcast %31 : vector<1x32xf32> to vector<16x32xf32>
    %33 = arith.mulf %30, %32 : vector<16x32xf32>
    %c0_10 = arith.constant 0 : index
    %c0_11 = arith.constant 0 : index
    %34 = vector.load %arg3[%c0_10, %c0_11] : memref<1x32xf32, #tpu.memory_space<vmem>>, vector<1x32xf32>
    %35 = vector.broadcast %34 : vector<1x32xf32> to vector<16x32xf32>
    %36 = arith.addf %33, %35 : vector<16x32xf32>
    %cst_12 = arith.constant 0.000000e+00 : f32
    %37 = vector.broadcast %cst_12 : f32 to vector<16x32xf32>
    %38 = arith.maximumf %36, %37 : vector<16x32xf32>
    %c0_13 = arith.constant 0 : index
    %c0_14 = arith.constant 0 : index
    %39 = vector.load %arg4[%c0_13, %c0_14] : memref<16x32xf32, #tpu.memory_space<vmem>>, vector<16x32xf32>
    tpu.vector_store %arg4[%c0_13, %c0_14], %38 {strides = array<i32>} : memref<16x32xf32, #tpu.memory_space<vmem>>, vector<16x32xf32>,
    return
  }
}

</mosaic_0001>

<llo_original>
// kernel: gatv2_layer.3
$region0: #{gatv2_layer.3}
  #allocation0 [shape = 'u32[]', space=smem, size = 0x4, offset = 0x4, fixed_abs, tag = 'smem constant byte address 0x4 - core index']
  #allocation1 [shape = 'u32[72,128]{1,0:T(1,128)}', space=vmem, size = 0x9000, scoped, tag = 'internal scratch']
  %s0 = inlined_call_operand.vmem [shape: f32[16,32], index: 0, kind: input, shape index: {}]
  %s1 = inlined_call_operand.vmem [shape: f32[32,256], index: 1, kind: input, shape index: {}]
  %s2 = inlined_call_operand.vmem [shape: f32[1,256], index: 2, kind: input, shape index: {}]
  %s3 = inlined_call_operand.vmem [shape: f32[16,128], index: 3, kind: output, shape index: {0}]
  %s4 = inlined_call_operand.vmem [shape: f32[16,128], index: 4, kind: output, shape index: {1}]
  %5 = xla_tuple %s3, %s4
  %s6 = sld [smem:[#allocation0]]
  $region30: #{gatv2_layer.3} parent=0
    _
  %s8 = ssub.s32 1, %s6
  %s9 = scalar_select 0, %s8, %s6
  // Predicated region
  $region2: #{gatv2_layer.3} parent=0 // pred_check
    _
  $region3: #{gatv2_layer.3} parent=0 // pred_check_branch
    %11 = sbr.rel (0) target = $region5
  $region4: #{gatv2_layer.3} parent=0 // pred_region
    _
  $region5: #{gatv2_layer.3} parent=0 // pred_fallthru
    _
  // Predicated region
  $region6: #{gatv2_layer.3} parent=0 // pred_check
    _
  $region7: #{gatv2_layer.3} parent=0 // pred_check_branch
    %13 = sbr.rel (0) target = $region9
  $region8: #{gatv2_layer.3} parent=0 // pred_region
    _
  $region9: #{gatv2_layer.3} parent=0 // pred_fallthru
    _
  // Predicated region
  $region10: #{gatv2_layer.3} parent=0 // pred_check
    _
  $region11: #{gatv2_layer.3} parent=0 // pred_check_branch
    %15 = sbr.rel (0) target = $region13
  $region12: #{gatv2_layer.3} parent=0 // pred_region
    _
  $region13: #{gatv2_layer.3} parent=0 // pred_fallthru
    _
  %v17 = vld [vmem:[%s0] sm:$0xff]
  %v18 = vld [vmem:[%s0 + $0x8] sm:$0xff]
  %v19 = vpack.c.bf16 %v18, %v17
  %v20 = vld [vmem:[%s1] sm:$0xff]
  %v21 = vld [vmem:[%s1 + $0x8] sm:$0xff]
  %v22 = vld [vmem:[%s1 + $0x10] sm:$0xff]
  %v23 = vld [vmem:[%s1 + $0x18] sm:$0xff]
  %v24 = vld [vmem:[%s1 + $0x20] sm:$0xff]
  %v25 = vld [vmem:[%s1 + $0x28] sm:$0xff]
  %v26 = vld [vmem:[%s1 + $0x30] sm:$0xff]
  %v27 = vld [vmem:[%s1 + $0x38] sm:$0xff]
  %v28 = vpack.c.bf16 %v22, %v20
  %v29 = vpack.c.bf16 %v23, %v21
  %v30 = vpack.c.bf16 %v26, %v24
  %v31 = vpack.c.bf16 %v27, %v25
  %v32 = vld [vmem:[%s2] sm:$0x3]
  %v34 = vperm.slane %v32, 0
  %v35 = vperm.slane %v32, 1
  %vm38 = vcmask 261120
  %v40 = vsel %vm38, %v19, 0
  %42 = vmatpush.bf16.msra.mxu0 0
  %43 = vmatpush.bf16.msra.mxu0 0
  %44 = vmatpush.bf16.msra.mxu0 0
  %45 = vmatpush.bf16.msra.mxu0 0
  %46 = vmatpush.bf16.msra.mxu0 0
  %47 = vmatpush.bf16.msra.mxu0 0
  %48 = vmatpush.bf16.msra.mxu0 %v30
  %49 = vmatpush.bf16.msra.mxu0 %v28
  %50 = vmatmul.bf16.gmra.mxu0 %v40
  %v51 = vpop.f32.mrf.mxu0
  %v52 = vadd.f32 %v34, %v51
  %v53 = vpop.f32.mrf.mxu0
  %v54 = vadd.f32 %v34, %v53
  %55 = vdwg.mxu0
  %56 = vmatpush.bf16.msra.mxu0 0
  %57 = vmatpush.bf16.msra.mxu0 0
  %58 = vmatpush.bf16.msra.mxu0 0
  %59 = vmatpush.bf16.msra.mxu0 0
  %60 = vmatpush.bf16.msra.mxu0 0
  %61 = vmatpush.bf16.msra.mxu0 0
  %62 = vmatpush.bf16.msra.mxu0 %v31
  %63 = vmatpush.bf16.msra.mxu0 %v29
  %64 = vmatmul.bf16.gmra.mxu0 %v40
  %v65 = vpop.f32.mrf.mxu0
  %v66 = vadd.f32 %v35, %v65
  %v67 = vpop.f32.mrf.mxu0
  %v68 = vadd.f32 %v35, %v67
  %69 = vdwg.mxu0
  %70 = vst [vmem:[%s3] sm:$0xff] %v52
  %71 = vst [vmem:[%s3 + $0x8] sm:$0xff] %v54
  %72 = vst [vmem:[%s4] sm:$0xff] %v66
  %73 = vst [vmem:[%s4 + $0x8] sm:$0xff] %v68
  // Predicated region
  $region14: #{gatv2_layer.3} parent=0 // pred_check
    _
  $region15: #{gatv2_layer.3} parent=0 // pred_check_branch
    %75 = sbr.rel (0) target = $region17
  $region16: #{gatv2_layer.3} parent=0 // pred_region
    _
  $region17: #{gatv2_layer.3} parent=0 // pred_fallthru
    _
  // Predicated region
  $region18: #{gatv2_layer.3} parent=0 // pred_check
    _
  $region19: #{gatv2_layer.3} parent=0 // pred_check_branch
    %77 = sbr.rel (0) target = $region21
  $region20: #{gatv2_layer.3} parent=0 // pred_region
    _
  $region21: #{gatv2_layer.3} parent=0 // pred_fallthru
    _
  // Predicated region
  $region22: #{gatv2_layer.3} parent=0 // pred_check
    _
  $region23: #{gatv2_layer.3} parent=0 // pred_check_branch
    %79 = sbr.rel (0) target = $region25
  $region24: #{gatv2_layer.3} parent=0 // pred_region
    _
  $region25: #{gatv2_layer.3} parent=0 // pred_fallthru
    _
  // Predicated region
  $region26: #{gatv2_layer.3} parent=0 // pred_check
    _
  $region27: #{gatv2_layer.3} parent=0 // pred_check_branch
    %81 = sbr.rel (0) target = $region29
  $region28: #{gatv2_layer.3} parent=0 // pred_region
    _
  $region29: #{gatv2_layer.3} parent=0 // pred_fallthru
    _

// kernel: gatv2_layer.5
$region0: #{gatv2_layer.5}
  #allocation0 [shape = 'u32[]', space=smem, size = 0x4, offset = 0x4, fixed_abs, tag = 'smem constant byte address 0x4 - core index']
  #allocation1 [shape = 'u32[72,128]{1,0:T(1,128)}', space=vmem, size = 0x9000, scoped, tag = 'internal scratch']
  %s0 = inlined_call_operand.vmem [shape: f32[16,128], index: 0, kind: input, shape index: {}]
  %s1 = inlined_call_operand.vmem [shape: f32[1,32], index: 1, kind: input, shape index: {}]
  %s2 = inlined_call_operand.vmem [shape: f32[1,32], index: 2, kind: input, shape index: {}]
  %s3 = inlined_call_operand.vmem [shape: f32[1,32], index: 3, kind: input, shape index: {}]
  %s4 = inlined_call_operand.hbm [shape: f32[16,32], index: 4, kind: output, shape index: {}]
  %s5 = sld [smem:[#allocation0]]
  $region26: #{gatv2_layer.5} parent=0
    _
  %s7 = ssub.s32 1, %s5
  %s8 = scalar_select 0, %s7, %s5
  $region1: #{gatv2_layer.5} parent=0
    #allocation2 [shape = 'u8[8192]{0}', space=vmem, size = 0x2000, scoped, tag = 'output window, operand 0, single buffered']
    #allocation3 [shape = 's32[1]{0}', space=sflag, size = 0x4, scoped, tag = 'scoped memory for gatv2_layer.5']
    %9 = vsyncpa [#allocation3], 0
    // Predicated region
    $region2: #{gatv2_layer.5} parent=1 // pred_check
      _
    $region3: #{gatv2_layer.5} parent=1 // pred_check_branch
      %11 = sbr.rel (0) target = $region5
    $region4: #{gatv2_layer.5} parent=1 // pred_region
      _
    $region5: #{gatv2_layer.5} parent=1 // pred_fallthru
      _
    // Predicated region
    $region6: #{gatv2_layer.5} parent=1 // pred_check
      _
    $region7: #{gatv2_layer.5} parent=1 // pred_check_branch
      %13 = sbr.rel (0) target = $region9
    $region8: #{gatv2_layer.5} parent=1 // pred_region
      _
    $region9: #{gatv2_layer.5} parent=1 // pred_fallthru
      _
    // Predicated region
    $region10: #{gatv2_layer.5} parent=1 // pred_check
      _
    $region11: #{gatv2_layer.5} parent=1 // pred_check_branch
      %15 = sbr.rel (0) target = $region13
    $region12: #{gatv2_layer.5} parent=1 // pred_region
      _
    $region13: #{gatv2_layer.5} parent=1 // pred_fallthru
      _
    // Predicated region
    $region14: #{gatv2_layer.5} parent=1 // pred_check
      _
    $region15: #{gatv2_layer.5} parent=1 // pred_check_branch
      %17 = sbr.rel (0) target = $region17
    $region16: #{gatv2_layer.5} parent=1 // pred_region
      _
    $region17: #{gatv2_layer.5} parent=1 // pred_fallthru
      _
    %v18 = vld [vmem:[%s0] sm:$0xff]
    %v19 = vld [vmem:[%s0 + $0x8] sm:$0xff]
    %22 = vrot.lane.b32.xlu0 %v18, 96
    %v23 = vpop.permute.xlu0 %22
    %24 = vrot.lane.b32.xlu0 %v19, 96
    %v25 = vpop.permute.xlu0 %24
    %v28 = vadd.f32 %v18, %v23
    %v29 = vadd.f32 %v19, %v25
    %30 = vrot.lane.b32.xlu0 %v18, 64
    %v31 = vpop.permute.xlu0 %30
    %32 = vrot.lane.b32.xlu0 %v19, 64
    %v33 = vpop.permute.xlu0 %32
    %v36 = vadd.f32 %v28, %v31
    %v37 = vadd.f32 %v29, %v33
    %38 = vrot.lane.b32.xlu0 %v18, 32
    %v39 = vpop.permute.xlu0 %38
    %40 = vrot.lane.b32.xlu0 %v19, 32
    %v41 = vpop.permute.xlu0 %40
    %v44 = vadd.f32 %v36, %v39
    %v45 = vadd.f32 %v37, %v41
    %v46 = vmul.f32 %v44, 0.25
    %v47 = vmul.f32 %v45, 0.25
    %v48 = vld [vmem:[%s1] sm:$0x1]
    %v50 = vperm.slane %v48, 0
    %v52 = vadd.f32 %v46, %v50
    %v53 = vadd.f32 %v47, %v50
    %vm54 = vcmask 261120
    %v55 = vsel %vm54, %v52, 0.0
    %v56 = vsel %vm54, %v53, 0.0
    %v57 = vadd.f32 %v55, %v56
    %v58 = vrot.slane %v57, 4
    %v59 = vadd.f32 %v57, %v58
    %v60 = vrot.slane %v59, 2
    %v61 = vadd.f32 %v59, %v60
    %v62 = vrot.slane %v61, 1
    %v63 = vadd.f32 %v61, %v62
    %v64 = vrcp.pop 16.0
    %v65 = vmul.f32 16.0, %v64
    %v66 = vsub.f32 1.0, %v65
    %v67 = vmul.f32 %v64, %v66
    %v68 = vadd.f32 %v64, %v67
    %vm69 = vweird.f32 %v64
    %v70 = vsel %vm69, %v64, %v68
    %v71 = vmul.f32 %v63, %v70
    %v72 = vsub.f32 %v52, %v71
    %v73 = vsub.f32 %v53, %v71
    %v74 = vmul.f32 %v72, %v72
    %v75 = vmul.f32 %v73, %v73
    %v76 = vsel %vm54, %v74, 0.0
    %v77 = vsel %vm54, %v75, 0.0
    %v78 = vadd.f32 %v76, %v77
    %v79 = vrot.slane %v78, 4
    %v80 = vadd.f32 %v78, %v79
    %v81 = vrot.slane %v80, 2
    %v82 = vadd.f32 %v80, %v81
    %v83 = vrot.slane %v82, 1
    %v84 = vadd.f32 %v82, %v83
    %v85 = vmul.f32 %v84, %v70
    %v86 = vadd.f32 %v85, 1e-05
    %v87 = vrsqrt.pop %v86
    %v88 = vmul.f32 %v87, %v86
    %v89 = vmul.f32 %v88, %v87
    %v90 = vmul.f32 0.5, %v89
    %v91 = vsub.f32 1.5, %v90
    %v92 = vmul.f32 %v87, %v91
    %vm93 = vweird.f32 %v86
    %vm94 = vweird.f32 %v87
    %vm95 = vmor %vm93, %vm94
    %v96 = vsel %vm95, %v87, %v92
    %v97 = vmul.f32 %v72, %v96
    %v98 = vmul.f32 %v73, %v96
    %v99 = vld [vmem:[%s2] sm:$0x1]
    %v101 = vperm.slane %v99, 0
    %v103 = vmul.f32 %v97, %v101
    %v104 = vmul.f32 %v98, %v101
    %v105 = vld [vmem:[%s3] sm:$0x1]
    %v107 = vperm.slane %v105, 0
    %v109 = vadd.f32 %v103, %v107
    %v110 = vadd.f32 %v104, %v107
    %v111 = vmax.f32 %v109, 0.0
    %v112 = vmax.f32 %v110, 0.0
    %113 = vst.msk [vmem:[#allocation2] sm:$0xff] %vm54, %v111
    %114 = vst.msk [vmem:[#allocation2 + $0x8] sm:$0xff] %vm54, %v112
    // Predicated region
    $region18: #{gatv2_layer.5} parent=1 // pred_check
      _
    $region19: #{gatv2_layer.5} parent=1 // pred_check_branch
      %116 = sbr.rel (0) target = $region21
    $region20: #{gatv2_layer.5} parent=1 // pred_region
      %118 = vsyncadd [#allocation3], 0
      %s119 = sshll.u32 [#allocation2], 4
      %s120 = int_to_ptr.vmem [resolvable:$true] %s119
      %s121 = sshll.u32 %s4, 4
      %s122 = int_to_ptr.hbm [resolvable:$true] %s121
      %127 = dma.vmem_to_hbm [thread:$0]  %s120, 256, %s122, [#allocation3], 128, 128, 8
    $region21: #{gatv2_layer.5} parent=1 // pred_fallthru
      _
    // Predicated region
    $region22: #{gatv2_layer.5} parent=1 // pred_check
      _
    $region23: #{gatv2_layer.5} parent=1 // pred_check_branch
      %129 = sbr.rel (0) target = $region25
    $region24: #{gatv2_layer.5} parent=1 // pred_region
      %131 = dma.done [#allocation3], 256
    $region25: #{gatv2_layer.5} parent=1 // pred_fallthru
      _
    %132 = vsyncpa [#allocation3], 1

// kernel: gatv2_layer.4
$region0: #{gatv2_layer.4}
  #allocation0 [shape = 'u32[]', space=smem, size = 0x4, offset = 0x4, fixed_abs, tag = 'smem constant byte address 0x4 - core index']
  #allocation1 [shape = 'u32[72,128]{1,0:T(1,128)}', space=vmem, size = 0x9000, scoped, tag = 'internal scratch']
  #allocation2 [shape = 'f32[32,1]{1,0:T(8,128)}', space=vmem, size = 0x4000, scoped, tag = 'scratch operand']
  #allocation3 [shape = 'f32[32,1]{1,0:T(8,128)}', space=vmem, size = 0x4000, scoped, tag = 'scratch operand']
  #allocation4 [shape = 'f32[32,128]{1,0:T(8,128)}', space=vmem, size = 0x4000, scoped, tag = 'scratch operand']
  %s0 = inlined_call_operand.vmem [shape: f32[16,128], index: 0, kind: input, shape index: {}]
  %s1 = inlined_call_operand.vmem [shape: f32[16,128], index: 1, kind: input, shape index: {}]
  %s2 = inlined_call_operand.vmem [shape: bf16[16,16,128], index: 2, kind: input, shape index: {}]
  %s3 = inlined_call_operand.vmem [shape: f32[16,16], index: 3, kind: input, shape index: {}]
  %s4 = inlined_call_operand.vmem [shape: f32[1,128], index: 4, kind: input, shape index: {}]
  %s5 = inlined_call_operand.vmem [shape: f32[16,128], index: 5, kind: output, shape index: {}]
  %s6 = sld [smem:[#allocation0]]
  $region61: #{gatv2_layer.4} parent=0
    _
  %s8 = ssub.s32 1, %s6
  %s9 = scalar_select 0, %s8, %s6
  loop: start=0, step=1, limit=4
  $region2: #{gatv2_layer.4} parent=0 // loop_pre_header
    _
  $region3: #{gatv2_layer.4} parent=0 // loop_header
    %s11 = sphi 0, %s15
    %p12 = scmp.ge.s32.totalorder %s11, 4
    %s18 = sphi 0, %s30
    %s19 = sphi 0, %s26
    %s20 = sphi 0, %s18
    %s21 = sphi 0, %s19
    %s22 = sphi 0, %s20
    %s23 = sphi 0, %s21
    %s33 = sphi 0, %s35
    %s36 = sphi 0, %s33
    %s37 = sphi 0, %s36
    %s53 = sphi 0, %s37
    %s59 = sphi 0, %s61
    %s62 = sphi 0, %s59
    %s63 = sphi 0, %s62
    %s79 = sphi 0, %s63
    %s87 = sphi 0, %s89
    %s90 = sphi 0, %s87
    %s91 = sphi 0, %s90
    %s107 = sphi 0, %s91
    %s115 = sphi 0, %s117
    %s118 = sphi 0, %s115
    %s119 = sphi 0, %s118
    %s135 = sphi 0, %s119
    %s139 = sphi 0, %s139
    %s141 = sphi 0, %s139
    %s142 = sphi 0, %s141
    %s156 = sphi 0, %s142
    %s162 = sphi 0, %s164
    %s165 = sphi 0, %s162
    %s166 = sphi 0, %s165
    %s182 = sphi 0, %s166
  $region4: #{gatv2_layer.4} parent=0 // loop_header_branch
    %14 = sbr.rel (%p12) target = $region8
  $region5: #{gatv2_layer.4} parent=0 // loop_body
    %s16 = ssub.s32 %s11, 1
    %s17 = ssub.s32 %s11, 2
    %s24 = sadd.s32 1, %s19
    %p25 = scmp.ge.s32.totalorder %s24, 1
    %s26 = scalar_select %p25, 0, %s24
    %s27 = sadd.s32 1, %s18
    %s28 = scalar_select %p25, %s27, %s18
    %p29 = scmp.ge.s32.totalorder %s28, 2
    %s30 = scalar_select %p29, 0, %s28
    %s31 = ssub.s32 %s18, %s30
    %p32 = scmp.eq.s32.totalorder %s31, 0
    %s34 = sadd.s32 %s33, 1
    %s35 = scalar_select %p32, %s33, %s34
    %p38 = pneg %p32
    %p39 = scmp.eq.s32.totalorder %s11, 1
    %p40 = por %p38, %p39
    %p41 = scmp.ne.s32.totalorder %s33, %s36
    %p42 = scmp.eq.s32.totalorder %s11, 0
    %p43 = por %p41, %p42
    %p44 = scmp.ne.s32.totalorder %s33, %s36
    %p45 = scmp.eq.s32.totalorder %s16, 1
    %p46 = por %p44, %p45
    %p47 = scmp.ne.s32.totalorder %s36, %s37
    %p48 = scmp.eq.s32.totalorder %s16, 0
    %p49 = por %p47, %p48
    %p50 = scmp.ne.s32.totalorder %s36, %s37
    %p51 = scmp.eq.s32.totalorder %s17, 1
    %p52 = por %p50, %p51
    %p54 = scmp.ne.s32.totalorder %s37, %s53
    %p55 = scmp.eq.s32.totalorder %s17, 0
    %p56 = por %p54, %p55
    %s57 = ssub.s32 %s19, %s26
    %p58 = scmp.eq.s32.totalorder %s57, 0
    %s60 = sadd.s32 %s59, 1
    %s61 = scalar_select %p58, %s59, %s60
    %p64 = pneg %p58
    %p65 = scmp.eq.s32.totalorder %s11, 1
    %p66 = por %p64, %p65
    %p67 = scmp.ne.s32.totalorder %s59, %s62
    %p68 = scmp.eq.s32.totalorder %s11, 0
    %p69 = por %p67, %p68
    %p70 = scmp.ne.s32.totalorder %s59, %s62
    %p71 = scmp.eq.s32.totalorder %s16, 1
    %p72 = por %p70, %p71
    %p73 = scmp.ne.s32.totalorder %s62, %s63
    %p74 = scmp.eq.s32.totalorder %s16, 0
    %p75 = por %p73, %p74
    %p76 = scmp.ne.s32.totalorder %s62, %s63
    %p77 = scmp.eq.s32.totalorder %s17, 1
    %p78 = por %p76, %p77
    %p80 = scmp.ne.s32.totalorder %s63, %s79
    %p81 = scmp.eq.s32.totalorder %s17, 0
    %p82 = por %p80, %p81
    %s83 = ssub.s32 %s18, %s30
    %s84 = ssub.s32 %s19, %s26
    %s85 = sor.u32 %s83, %s84
    %p86 = scmp.eq.s32.totalorder %s85, 0
    %s88 = sadd.s32 %s87, 1
    %s89 = scalar_select %p86, %s87, %s88
    %p92 = pneg %p86
    %p93 = scmp.eq.s32.totalorder %s11, 1
    %p94 = por %p92, %p93
    %p95 = scmp.ne.s32.totalorder %s87, %s90
    %p96 = scmp.eq.s32.totalorder %s11, 0
    %p97 = por %p95, %p96
    %p98 = scmp.ne.s32.totalorder %s87, %s90
    %p99 = scmp.eq.s32.totalorder %s16, 1
    %p100 = por %p98, %p99
    %p101 = scmp.ne.s32.totalorder %s90, %s91
    %p102 = scmp.eq.s32.totalorder %s16, 0
    %p103 = por %p101, %p102
    %p104 = scmp.ne.s32.totalorder %s90, %s91
    %p105 = scmp.eq.s32.totalorder %s17, 1
    %p106 = por %p104, %p105
    %p108 = scmp.ne.s32.totalorder %s91, %s107
    %p109 = scmp.eq.s32.totalorder %s17, 0
    %p110 = por %p108, %p109
    %s111 = ssub.s32 %s18, %s30
    %s112 = ssub.s32 %s19, %s26
    %s113 = sor.u32 %s111, %s112
    %p114 = scmp.eq.s32.totalorder %s113, 0
    %s116 = sadd.s32 %s115, 1
    %s117 = scalar_select %p114, %s115, %s116
    %p120 = pneg %p114
    %p121 = scmp.eq.s32.totalorder %s11, 1
    %p122 = por %p120, %p121
    %p123 = scmp.ne.s32.totalorder %s115, %s118
    %p124 = scmp.eq.s32.totalorder %s11, 0
    %p125 = por %p123, %p124
    %p126 = scmp.ne.s32.totalorder %s115, %s118
    %p127 = scmp.eq.s32.totalorder %s16, 1
    %p128 = por %p126, %p127
    %p129 = scmp.ne.s32.totalorder %s118, %s119
    %p130 = scmp.eq.s32.totalorder %s16, 0
    %p131 = por %p129, %p130
    %p132 = scmp.ne.s32.totalorder %s118, %s119
    %p133 = scmp.eq.s32.totalorder %s17, 1
    %p134 = por %p132, %p133
    %p136 = scmp.ne.s32.totalorder %s119, %s135
    %p137 = scmp.eq.s32.totalorder %s17, 0
    %p138 = por %p136, %p137
    %s140 = sadd.s32 %s139, 1
    %p143 = scmp.eq.s32.totalorder %s11, 1
    %p144 = scmp.ne.s32.totalorder %s139, %s141
    %p145 = scmp.eq.s32.totalorder %s11, 0
    %p146 = por %p144, %p145
    %p147 = scmp.ne.s32.totalorder %s139, %s141
    %p148 = scmp.eq.s32.totalorder %s16, 1
    %p149 = por %p147, %p148
    %p150 = scmp.ne.s32.totalorder %s141, %s142
    %p151 = scmp.eq.s32.totalorder %s16, 0
    %p152 = por %p150, %p151
    %p153 = scmp.ne.s32.totalorder %s141, %s142
    %p154 = scmp.eq.s32.totalorder %s17, 1
    %p155 = por %p153, %p154
    %p157 = scmp.ne.s32.totalorder %s142, %s156
    %p158 = scmp.eq.s32.totalorder %s17, 0
    %p159 = por %p157, %p158
    %s160 = ssub.s32 %s18, %s30
    %p161 = scmp.eq.s32.totalorder %s160, 0
    %s163 = sadd.s32 %s162, 1
    %s164 = scalar_select %p161, %s162, %s163
    %p167 = pneg %p161
    %p168 = scmp.eq.s32.totalorder %s11, 1
    %p169 = por %p167, %p168
    %p170 = scmp.ne.s32.totalorder %s162, %s165
    %p171 = scmp.eq.s32.totalorder %s11, 0
    %p172 = por %p170, %p171
    %p173 = scmp.ne.s32.totalorder %s162, %s165
    %p174 = scmp.eq.s32.totalorder %s16, 1
    %p175 = por %p173, %p174
    %p176 = scmp.ne.s32.totalorder %s165, %s166
    %p177 = scmp.eq.s32.totalorder %s16, 0
    %p178 = por %p176, %p177
    %p179 = scmp.ne.s32.totalorder %s165, %s166
    %p180 = scmp.eq.s32.totalorder %s17, 1
    %p181 = por %p179, %p180
    %p183 = scmp.ne.s32.totalorder %s166, %s182
    %p184 = scmp.eq.s32.totalorder %s17, 0
    %p185 = por %p183, %p184
    %p186 = scmp.le.s32.totalorder 1, %s11
    %p187 = scmp.lt.s32.totalorder %s11, 3
    %p188 = pnand %p186, %p187
    %p189 = pneg %p188
    // Predicated region
    $region9: #{gatv2_layer.4} parent=5 // pred_check
      _
    $region10: #{gatv2_layer.4} parent=5 // pred_check_branch
      %191 = sbr.rel (%p188) target = $region12
    $region11: #{gatv2_layer.4} parent=5 // pred_region
      %s192 = ssub.s32 %s11, 1
      // Predicated region
      $region13: #{gatv2_layer.4} parent=11 // pred_check
        %p193 = pneg %p75
      $region14: #{gatv2_layer.4} parent=11 // pred_check_branch
        %195 = sbr.rel (%p193) target = $region16
      $region15: #{gatv2_layer.4} parent=11 // pred_region
        %s196 = smul.u32 2, %s21
        %p197 = scmp.lt.s32.totalorder %s196, 1
        %s198 = scalar_select %p197, %s196, 1
        %s199 = smul.addr %s198, 8
        %s200 = scalar_lea.vmem %s1, %s199
        %s201 = smul.u32 2, %s21
      $region16: #{gatv2_layer.4} parent=11 // pred_fallthru
        _
      // Predicated region
      $region17: #{gatv2_layer.4} parent=11 // pred_check
        %p202 = pneg %p152
      $region18: #{gatv2_layer.4} parent=11 // pred_check_branch
        %204 = sbr.rel (%p202) target = $region20
      $region19: #{gatv2_layer.4} parent=11 // pred_region
        _
      $region20: #{gatv2_layer.4} parent=11 // pred_fallthru
        _
    $region12: #{gatv2_layer.4} parent=5 // pred_fallthru
      _
    %p205 = scmp.lt.s32.totalorder %s11, 2
    // Predicated region
    $region21: #{gatv2_layer.4} parent=5 // pred_check
      %p206 = pneg %p205
    $region22: #{gatv2_layer.4} parent=5 // pred_check_branch
      %208 = sbr.rel (%p206) target = $region24
    $region23: #{gatv2_layer.4} parent=5 // pred_region
      // Predicated region
      $region25: #{gatv2_layer.4} parent=23 // pred_check
        %p209 = pneg %p43
      $region26: #{gatv2_layer.4} parent=23 // pred_check_branch
        %211 = sbr.rel (%p209) target = $region28
      $region27: #{gatv2_layer.4} parent=23 // pred_region
        %p212 = scmp.lt.s32.totalorder %s18, 1
        %s213 = scalar_select %p212, %s18, 1
        %s214 = smul.addr %s213, 8
        %s215 = scalar_lea.vmem %s0, %s214
      $region28: #{gatv2_layer.4} parent=23 // pred_fallthru
        _
      // Predicated region
      $region29: #{gatv2_layer.4} parent=23 // pred_check
        %p216 = pneg %p97
      $region30: #{gatv2_layer.4} parent=23 // pred_check_branch
        %218 = sbr.rel (%p216) target = $region32
      $region31: #{gatv2_layer.4} parent=23 // pred_region
        %s219 = smul.u32 8, %s18
        %s220 = smul.u32 2, %s19
        %p221 = scmp.lt.s32.totalorder %s219, 15
        %s222 = scalar_select %p221, %s219, 15
        %p223 = scmp.lt.s32.totalorder %s220, 1
        %s224 = scalar_select %p223, %s220, 1
        %s225 = smul.addr %s222, 2
        %s226 = sadd.s32 %s224, %s225
        %s227 = smul.addr %s226, 4
        %s228 = scalar_lea.vmem %s2, %s227
        %s229 = smul.u32 8, %s18
        %s230 = smul.u32 2, %s19
      $region32: #{gatv2_layer.4} parent=23 // pred_fallthru
        _
      // Predicated region
      $region33: #{gatv2_layer.4} parent=23 // pred_check
        %p231 = pneg %p125
      $region34: #{gatv2_layer.4} parent=23 // pred_check_branch
        %233 = sbr.rel (%p231) target = $region36
      $region35: #{gatv2_layer.4} parent=23 // pred_region
        %p234 = scmp.lt.s32.totalorder %s18, 1
        %s235 = scalar_select %p234, %s18, 1
        %p236 = scmp.lt.s32.totalorder %s19, 0
        %s237 = scalar_select %p236, %s19, 0
        %s238 = sadd.s32 %s237, %s235
        %s239 = smul.addr %s238, 8
        %s240 = scalar_lea.vmem %s3, %s239
      $region36: #{gatv2_layer.4} parent=23 // pred_fallthru
        _
    $region24: #{gatv2_layer.4} parent=5 // pred_fallthru
      _
    %p241 = scmp.le.s32.totalorder 1, %s11
    %p242 = scmp.lt.s32.totalorder %s11, 3
    %p243 = pnand %p241, %p242
    %p244 = pneg %p243
    // Predicated region
    $region37: #{gatv2_layer.4} parent=5 // pred_check
      _
    $region38: #{gatv2_layer.4} parent=5 // pred_check_branch
      %246 = sbr.rel (%p243) target = $region40
    $region39: #{gatv2_layer.4} parent=5 // pred_region
      %s247 = ssub.s32 %s11, 1
      %p248 = scmp.lt.s32.totalorder %s20, 1
      %s249 = scalar_select %p248, %s20, 1
      %s250 = smul.addr %s249, 8
      %s251 = scalar_lea.vmem %s0, %s250
      %p252 = pneg %p49
      %p253 = pneg %p46
      %s254 = smul.u32 2, %s21
      %p255 = scmp.lt.s32.totalorder %s254, 1
      %s256 = scalar_select %p255, %s254, 1
      %s257 = smul.addr %s256, 8
      %s258 = scalar_lea.vmem %s1, %s257
      %p259 = pneg %p75
      %p260 = pneg %p72
      %s261 = smul.u32 8, %s20
      %s262 = smul.u32 2, %s21
      %p263 = scmp.lt.s32.totalorder %s261, 15
      %s264 = scalar_select %p263, %s261, 15
      %p265 = scmp.lt.s32.totalorder %s262, 1
      %s266 = scalar_select %p265, %s262, 1
      %s267 = smul.addr %s264, 2
      %s268 = sadd.s32 %s266, %s267
      %s269 = smul.addr %s268, 4
      %s270 = scalar_lea.vmem %s2, %s269
      %p271 = pneg %p103
      %p272 = pneg %p100
      %p273 = scmp.lt.s32.totalorder %s20, 1
      %s274 = scalar_select %p273, %s20, 1
      %p275 = scmp.lt.s32.totalorder %s21, 0
      %s276 = scalar_select %p275, %s21, 0
      %s277 = sadd.s32 %s276, %s274
      %s278 = smul.addr %s277, 8
      %s279 = scalar_lea.vmem %s3, %s278
      %p280 = pneg %p131
      %p281 = pneg %p128
      %p282 = pneg %p152
      %p283 = pneg %p149
      %p284 = pneg %p178
      %p285 = pneg %p175
      %p286 = scmp.lt.s32.totalorder %s20, 1
      %s287 = scalar_select %p286, %s20, 1
      %s288 = smul.addr %s287, 8
      %s289 = scalar_lea.vmem %s5, %s288
      %p290 = scmp.lt.s32.totalorder %s20, 1
      %s291 = scalar_select %p290, %s20, 1
      %s292 = smul.addr %s291, 8
      %s293 = scalar_lea.vmem %s0, %s292
      %s294 = smul.u32 2, %s21
      %p295 = scmp.lt.s32.totalorder %s294, 1
      %s296 = scalar_select %p295, %s294, 1
      %s297 = smul.addr %s296, 8
      %s298 = scalar_lea.vmem %s1, %s297
      %s299 = smul.u32 2, %s21
      %s300 = smul.u32 8, %s20
      %s301 = smul.u32 2, %s21
      %p302 = scmp.lt.s32.totalorder %s300, 15
      %s303 = scalar_select %p302, %s300, 15
      %p304 = scmp.lt.s32.totalorder %s301, 1
      %s305 = scalar_select %p304, %s301, 1
      %s306 = smul.addr %s303, 2
      %s307 = sadd.s32 %s305, %s306
      %s308 = smul.addr %s307, 4
      %s309 = scalar_lea.vmem %s2, %s308
      %s310 = smul.u32 8, %s20
      %s311 = smul.u32 2, %s21
      %p312 = scmp.lt.s32.totalorder %s20, 1
      %s313 = scalar_select %p312, %s20, 1
      %p314 = scmp.lt.s32.totalorder %s21, 0
      %s315 = scalar_select %p314, %s21, 0
      %s316 = sadd.s32 %s315, %s313
      %s317 = smul.addr %s316, 8
      %s318 = scalar_lea.vmem %s3, %s317
      %p319 = scmp.lt.s32.totalorder %s20, 1
      %s320 = scalar_select %p319, %s20, 1
      %s321 = smul.addr %s320, 8
      %s322 = scalar_lea.vmem %s5, %s321
      %p324 = scmp.eq.s32.totalorder %s21, 0
      // Predicated region
      $region41: #{gatv2_layer.4} parent=39 // pred_check
        %p325 = pneg %p324
      $region42: #{gatv2_layer.4} parent=39 // pred_check_branch
        %327 = sbr.rel (%p325) target = $region44
      $region43: #{gatv2_layer.4} parent=39 // pred_region
        %vm328 = vcmask 7168
        %329 = vst.msk [vmem:[#allocation2] sm:$0xff] %vm328, -1e+30
        %330 = vst.msk [vmem:[#allocation2 + $0x8] sm:$0xff] %vm328, -1e+30
        %331 = vst.msk [vmem:[#allocation2 + $0x10] sm:$0xff] %vm328, -1e+30
        %332 = vst.msk [vmem:[#allocation2 + $0x18] sm:$0xff] %vm328, -1e+30
        %333 = vst.msk [vmem:[#allocation3] sm:$0xff] %vm328, 0.0
        %334 = vst.msk [vmem:[#allocation3 + $0x8] sm:$0xff] %vm328, 0.0
        %335 = vst.msk [vmem:[#allocation3 + $0x10] sm:$0xff] %vm328, 0.0
        %336 = vst.msk [vmem:[#allocation3 + $0x18] sm:$0xff] %vm328, 0.0
        %337 = vst [vmem:[#allocation4] sm:$0xff] 0.0
        %338 = vst [vmem:[#allocation4 + $0x8] sm:$0xff] 0.0
        %339 = vst [vmem:[#allocation4 + $0x10] sm:$0xff] 0.0
        %340 = vst [vmem:[#allocation4 + $0x18] sm:$0xff] 0.0
      $region44: #{gatv2_layer.4} parent=39 // pred_fallthru
        _
      %v341 = vld [vmem:[%s293] sm:$0xff]
      %v342 = vld [vmem:[%s298] sm:$0xff]
      %v343 = vld [vmem:[%s298 + $0x8] sm:$0xff]
      %v344 = vld [vmem:[%s318] sm:$0xff]
      %v345 = vld [vmem:[%s4] sm:$0x1]
      %v347 = vrot.slane %v341, 1
      %v348 = vrot.slane %v341, 2
      %v349 = vrot.slane %v341, 3
      %v350 = vrot.slane %v341, 4
      %v351 = vrot.slane %v341, 5
      %v352 = vrot.slane %v341, 6
      %v353 = vrot.slane %v341, 7
      %v354 = vperm.slane %v341, 0
      %v355 = vperm.slane %v347, 0
      %v356 = vperm.slane %v348, 0
      %v357 = vperm.slane %v349, 0
      %v358 = vperm.slane %v350, 0
      %v359 = vperm.slane %v351, 0
      %v360 = vperm.slane %v352, 0
      %v361 = vperm.slane %v353, 0
      %v370 = vadd.f32 %v354, %v342
      %v371 = vadd.f32 %v354, %v343
      %v372 = vadd.f32 %v355, %v342
      %v373 = vadd.f32 %v355, %v343
      %v374 = vadd.f32 %v356, %v342
      %v375 = vadd.f32 %v356, %v343
      %v376 = vadd.f32 %v357, %v342
      %v377 = vadd.f32 %v357, %v343
      %v378 = vadd.f32 %v358, %v342
      %v379 = vadd.f32 %v358, %v343
      %v380 = vadd.f32 %v359, %v342
      %v381 = vadd.f32 %v359, %v343
      %v382 = vadd.f32 %v360, %v342
      %v383 = vadd.f32 %v360, %v343
      %v384 = vadd.f32 %v361, %v342
      %v385 = vadd.f32 %v361, %v343
      %v386 = vld [vmem:[%s309] sm:$0xf]
      %v387 = vld [vmem:[%s309 + $0x4] sm:$0xf]
      %v388 = vld [vmem:[%s309 + $0x8] sm:$0xf]
      %v389 = vld [vmem:[%s309 + $0xc] sm:$0xf]
      %v390 = vld [vmem:[%s309 + $0x10] sm:$0xf]
      %v391 = vld [vmem:[%s309 + $0x14] sm:$0xf]
      %v392 = vld [vmem:[%s309 + $0x18] sm:$0xf]
      %v393 = vld [vmem:[%s309 + $0x1c] sm:$0xf]
      %v394 = vld [vmem:[%s309 + $0x20] sm:$0xf]
      %v395 = vld [vmem:[%s309 + $0x24] sm:$0xf]
      %v396 = vld [vmem:[%s309 + $0x28] sm:$0xf]
      %v397 = vld [vmem:[%s309 + $0x2c] sm:$0xf]
      %v398 = vld [vmem:[%s309 + $0x30] sm:$0xf]
      %v399 = vld [vmem:[%s309 + $0x34] sm:$0xf]
      %v400 = vld [vmem:[%s309 + $0x38] sm:$0xf]
      %v401 = vld [vmem:[%s309 + $0x3c] sm:$0xf]
      %v402 = vunpack.c.l.bf16 %v386
      %v403 = vunpack.c.l.bf16 %v387
      %v404 = vunpack.c.l.bf16 %v388
      %v405 = vunpack.c.l.bf16 %v389
      %v406 = vunpack.c.l.bf16 %v390
      %v407 = vunpack.c.l.bf16 %v391
      %v408 = vunpack.c.l.bf16 %v392
      %v409 = vunpack.c.l.bf16 %v393
      %v410 = vunpack.c.l.bf16 %v394
      %v411 = vunpack.c.l.bf16 %v395
      %v412 = vunpack.c.l.bf16 %v396
      %v413 = vunpack.c.l.bf16 %v397
      %v414 = vunpack.c.l.bf16 %v398
      %v415 = vunpack.c.l.bf16 %v399
      %v416 = vunpack.c.l.bf16 %v400
      %v417 = vunpack.c.l.bf16 %v401
      %v418 = vadd.f32 %v370, %v402
      %v419 = vadd.f32 %v371, %v403
      %v420 = vadd.f32 %v372, %v404
      %v421 = vadd.f32 %v373, %v405
      %v422 = vadd.f32 %v374, %v406
      %v423 = vadd.f32 %v375, %v407
      %v424 = vadd.f32 %v376, %v408
      %v425 = vadd.f32 %v377, %v409
      %v426 = vadd.f32 %v378, %v410
      %v427 = vadd.f32 %v379, %v411
      %v428 = vadd.f32 %v380, %v412
      %v429 = vadd.f32 %v381, %v413
      %v430 = vadd.f32 %v382, %v414
      %v431 = vadd.f32 %v383, %v415
      %v432 = vadd.f32 %v384, %v416
      %v433 = vadd.f32 %v385, %v417
      %vm434 = vcmp.ge.f32.partialorder %v418, 0.0
      %vm435 = vcmp.ge.f32.partialorder %v419, 0.0
      %vm436 = vcmp.ge.f32.partialorder %v420, 0.0
      %vm437 = vcmp.ge.f32.partialorder %v421, 0.0
      %vm438 = vcmp.ge.f32.partialorder %v422, 0.0
      %vm439 = vcmp.ge.f32.partialorder %v423, 0.0
      %vm440 = vcmp.ge.f32.partialorder %v424, 0.0
      %vm441 = vcmp.ge.f32.partialorder %v425, 0.0
      %vm442 = vcmp.ge.f32.partialorder %v426, 0.0
      %vm443 = vcmp.ge.f32.partialorder %v427, 0.0
      %vm444 = vcmp.ge.f32.partialorder %v428, 0.0
      %vm445 = vcmp.ge.f32.partialorder %v429, 0.0
      %vm446 = vcmp.ge.f32.partialorder %v430, 0.0
      %vm447 = vcmp.ge.f32.partialorder %v431, 0.0
      %vm448 = vcmp.ge.f32.partialorder %v432, 0.0
      %vm449 = vcmp.ge.f32.partialorder %v433, 0.0
      %v450 = vmul.f32 %v418, 0.2
      %v451 = vmul.f32 %v419, 0.2
      %v452 = vmul.f32 %v420, 0.2
      %v453 = vmul.f32 %v421, 0.2
      %v454 = vmul.f32 %v422, 0.2
      %v455 = vmul.f32 %v423, 0.2
      %v456 = vmul.f32 %v424, 0.2
      %v457 = vmul.f32 %v425, 0.2
      %v458 = vmul.f32 %v426, 0.2
      %v459 = vmul.f32 %v427, 0.2
      %v460 = vmul.f32 %v428, 0.2
      %v461 = vmul.f32 %v429, 0.2
      %v462 = vmul.f32 %v430, 0.2
      %v463 = vmul.f32 %v431, 0.2
      %v464 = vmul.f32 %v432, 0.2
      %v465 = vmul.f32 %v433, 0.2
      %v466 = vsel %vm434, %v418, %v450
      %v467 = vsel %vm435, %v419, %v451
      %v468 = vsel %vm436, %v420, %v452
      %v469 = vsel %vm437, %v421, %v453
      %v470 = vsel %vm438, %v422, %v454
      %v471 = vsel %vm439, %v423, %v455
      %v472 = vsel %vm440, %v424, %v456
      %v473 = vsel %vm441, %v425, %v457
      %v474 = vsel %vm442, %v426, %v458
      %v475 = vsel %vm443, %v427, %v459
      %v476 = vsel %vm444, %v428, %v460
      %v477 = vsel %vm445, %v429, %v461
      %v478 = vsel %vm446, %v430, %v462
      %v479 = vsel %vm447, %v431, %v463
      %v480 = vsel %vm448, %v432, %v464
      %v481 = vsel %vm449, %v433, %v465
      %v483 = vperm.slane %v345, 0
      %v485 = vmul.f32 %v466, %v483
      %v486 = vmul.f32 %v467, %v483
      %v487 = vmul.f32 %v468, %v483
      %v488 = vmul.f32 %v469, %v483
      %v489 = vmul.f32 %v470, %v483
      %v490 = vmul.f32 %v471, %v483
      %v491 = vmul.f32 %v472, %v483
      %v492 = vmul.f32 %v473, %v483
      %v493 = vmul.f32 %v474, %v483
      %v494 = vmul.f32 %v475, %v483
      %v495 = vmul.f32 %v476, %v483
      %v496 = vmul.f32 %v477, %v483
      %v497 = vmul.f32 %v478, %v483
      %v498 = vmul.f32 %v479, %v483
      %v499 = vmul.f32 %v480, %v483
      %v500 = vmul.f32 %v481, %v483
      %vm501 = vcmp.gt.f32.partialorder %v344, 0.0
      %vm502 = vcmask 261120
      %v503 = vsel %vm502, %v485, 0.0
      %504 = vadd.xlane.f32.xlu0 %v503
      %v505 = vpop.xlane.xlu0 %504
      %v506 = vsel %vm502, %v486, 0.0
      %507 = vadd.xlane.f32.xlu0 %v506
      %v508 = vpop.xlane.xlu0 %507
      %v509 = vsel %vm502, %v487, 0.0
      %510 = vadd.xlane.f32.xlu0 %v509
      %v511 = vpop.xlane.xlu0 %510
      %v512 = vsel %vm502, %v488, 0.0
      %513 = vadd.xlane.f32.xlu0 %v512
      %v514 = vpop.xlane.xlu0 %513
      %v515 = vsel %vm502, %v489, 0.0
      %516 = vadd.xlane.f32.xlu0 %v515
      %v517 = vpop.xlane.xlu0 %516
      %v518 = vsel %vm502, %v490, 0.0
      %519 = vadd.xlane.f32.xlu0 %v518
      %v520 = vpop.xlane.xlu0 %519
      %v521 = vsel %vm502, %v491, 0.0
      %522 = vadd.xlane.f32.xlu0 %v521
      %v523 = vpop.xlane.xlu0 %522
      %v524 = vsel %vm502, %v492, 0.0
      %525 = vadd.xlane.f32.xlu0 %v524
      %v526 = vpop.xlane.xlu0 %525
      %v527 = vsel %vm502, %v493, 0.0
      %528 = vadd.xlane.f32.xlu0 %v527
      %v529 = vpop.xlane.xlu0 %528
      %v530 = vsel %vm502, %v494, 0.0
      %531 = vadd.xlane.f32.xlu0 %v530
      %v532 = vpop.xlane.xlu0 %531
      %v533 = vsel %vm502, %v495, 0.0
      %534 = vadd.xlane.f32.xlu0 %v533
      %v535 = vpop.xlane.xlu0 %534
      %v536 = vsel %vm502, %v496, 0.0
      %537 = vadd.xlane.f32.xlu0 %v536
      %v538 = vpop.xlane.xlu0 %537
      %v539 = vsel %vm502, %v497, 0.0
      %540 = vadd.xlane.f32.xlu0 %v539
      %v541 = vpop.xlane.xlu0 %540
      %v542 = vsel %vm502, %v498, 0.0
      %543 = vadd.xlane.f32.xlu0 %v542
      %v544 = vpop.xlane.xlu0 %543
      %v545 = vsel %vm502, %v499, 0.0
      %546 = vadd.xlane.f32.xlu0 %v545
      %v547 = vpop.xlane.xlu0 %546
      %v548 = vsel %vm502, %v500, 0.0
      %549 = vadd.xlane.f32.xlu0 %v548
      %v550 = vpop.xlane.xlu0 %549
      %v567 = vlaneseq
      %v568 = vand.u32 %v567, 127
      %v569 = vperm.slane %v505, %v568
      %v570 = vadd.s32 %v568, 4294967288
      %v571 = vperm.slane %v508, %v570
      %vm572 = vcmask 130112
      %v573 = vsel %vm572, %v571, %v569
      %v574 = vperm.slane %v511, %v568
      %v575 = vperm.slane %v514, %v570
      %v576 = vsel %vm572, %v575, %v574
      %v577 = vperm.slane %v517, %v568
      %v578 = vperm.slane %v520, %v570
      %v579 = vsel %vm572, %v578, %v577
      %v580 = vperm.slane %v523, %v568
      %v581 = vperm.slane %v526, %v570
      %v582 = vsel %vm572, %v581, %v580
      %v583 = vperm.slane %v529, %v568
      %v584 = vperm.slane %v532, %v570
      %v585 = vsel %vm572, %v584, %v583
      %v586 = vperm.slane %v535, %v568
      %v587 = vperm.slane %v538, %v570
      %v588 = vsel %vm572, %v587, %v586
      %v589 = vperm.slane %v541, %v568
      %v590 = vperm.slane %v544, %v570
      %v591 = vsel %vm572, %v590, %v589
      %v592 = vperm.slane %v547, %v568
      %v593 = vperm.slane %v550, %v570
      %v594 = vsel %vm572, %v593, %v592
      %vm595 = vcmask 1041409
      %v596 = vsel %vm595, %v576, %v573
      %vm597 = vcmask 1042434
      %v598 = vsel %vm597, %v579, %v596
      %vm599 = vcmask 1043459
      %v600 = vsel %vm599, %v582, %v598
      %vm601 = vcmask 1044484
      %v602 = vsel %vm601, %v585, %v600
      %vm603 = vcmask 1045509
      %v604 = vsel %vm603, %v588, %v602
      %vm605 = vcmask 1046534
      %v606 = vsel %vm605, %v591, %v604
      %vm607 = vcmask 1047559
      %v608 = vsel %vm607, %v594, %v606
      %v610 = vsel %vm501, %v608, -1e+30
      %627 = vrot.lane.b32.xlu0 %v485, 96
      %v628 = vpop.permute.xlu0 %627
      %629 = vrot.lane.b32.xlu0 %v486, 96
      %v630 = vpop.permute.xlu0 %629
      %631 = vrot.lane.b32.xlu0 %v487, 96
      %v632 = vpop.permute.xlu0 %631
      %633 = vrot.lane.b32.xlu0 %v488, 96
      %v634 = vpop.permute.xlu0 %633
      %635 = vrot.lane.b32.xlu0 %v489, 96
      %v636 = vpop.permute.xlu0 %635
      %637 = vrot.lane.b32.xlu0 %v490, 96
      %v638 = vpop.permute.xlu0 %637
      %639 = vrot.lane.b32.xlu0 %v491, 96
      %v640 = vpop.permute.xlu0 %639
      %641 = vrot.lane.b32.xlu0 %v492, 96
      %v642 = vpop.permute.xlu0 %641
      %643 = vrot.lane.b32.xlu0 %v493, 96
      %v644 = vpop.permute.xlu0 %643
      %645 = vrot.lane.b32.xlu0 %v494, 96
      %v646 = vpop.permute.xlu0 %645
      %647 = vrot.lane.b32.xlu0 %v495, 96
      %v648 = vpop.permute.xlu0 %647
      %649 = vrot.lane.b32.xlu0 %v496, 96
      %v650 = vpop.permute.xlu0 %649
      %651 = vrot.lane.b32.xlu0 %v497, 96
      %v652 = vpop.permute.xlu0 %651
      %653 = vrot.lane.b32.xlu0 %v498, 96
      %v654 = vpop.permute.xlu0 %653
      %655 = vrot.lane.b32.xlu0 %v499, 96
      %v656 = vpop.permute.xlu0 %655
      %657 = vrot.lane.b32.xlu0 %v500, 96
      %v658 = vpop.permute.xlu0 %657
      %v675 = vsel %vm502, %v628, 0.0
      %676 = vadd.xlane.f32.xlu0 %v675
      %v677 = vpop.xlane.xlu0 %676
      %v678 = vsel %vm502, %v630, 0.0
      %679 = vadd.xlane.f32.xlu0 %v678
      %v680 = vpop.xlane.xlu0 %679
      %v681 = vsel %vm502, %v632, 0.0
      %682 = vadd.xlane.f32.xlu0 %v681
      %v683 = vpop.xlane.xlu0 %682
      %v684 = vsel %vm502, %v634, 0.0
      %685 = vadd.xlane.f32.xlu0 %v684
      %v686 = vpop.xlane.xlu0 %685
      %v687 = vsel %vm502, %v636, 0.0
      %688 = vadd.xlane.f32.xlu0 %v687
      %v689 = vpop.xlane.xlu0 %688
      %v690 = vsel %vm502, %v638, 0.0
      %691 = vadd.xlane.f32.xlu0 %v690
      %v692 = vpop.xlane.xlu0 %691
      %v693 = vsel %vm502, %v640, 0.0
      %694 = vadd.xlane.f32.xlu0 %v693
      %v695 = vpop.xlane.xlu0 %694
      %v696 = vsel %vm502, %v642, 0.0
      %697 = vadd.xlane.f32.xlu0 %v696
      %v698 = vpop.xlane.xlu0 %697
      %v699 = vsel %vm502, %v644, 0.0
      %700 = vadd.xlane.f32.xlu0 %v699
      %v701 = vpop.xlane.xlu0 %700
      %v702 = vsel %vm502, %v646, 0.0
      %703 = vadd.xlane.f32.xlu0 %v702
      %v704 = vpop.xlane.xlu0 %703
      %v705 = vsel %vm502, %v648, 0.0
      %706 = vadd.xlane.f32.xlu0 %v705
      %v707 = vpop.xlane.xlu0 %706
      %v708 = vsel %vm502, %v650, 0.0
      %709 = vadd.xlane.f32.xlu0 %v708
      %v710 = vpop.xlane.xlu0 %709
      %v711 = vsel %vm502, %v652, 0.0
      %712 = vadd.xlane.f32.xlu0 %v711
      %v713 = vpop.xlane.xlu0 %712
      %v714 = vsel %vm502, %v654, 0.0
      %715 = vadd.xlane.f32.xlu0 %v714
      %v716 = vpop.xlane.xlu0 %715
      %v717 = vsel %vm502, %v656, 0.0
      %718 = vadd.xlane.f32.xlu0 %v717
      %v719 = vpop.xlane.xlu0 %718
      %v720 = vsel %vm502, %v658, 0.0
      %721 = vadd.xlane.f32.xlu0 %v720
      %v722 = vpop.xlane.xlu0 %721
      %v739 = vperm.slane %v677, %v568
      %v740 = vperm.slane %v680, %v570
      %v741 = vsel %vm572, %v740, %v739
      %v742 = vperm.slane %v683, %v568
      %v743 = vperm.slane %v686, %v570
      %v744 = vsel %vm572, %v743, %v742
      %v745 = vperm.slane %v689, %v568
      %v746 = vperm.slane %v692, %v570
      %v747 = vsel %vm572, %v746, %v745
      %v748 = vperm.slane %v695, %v568
      %v749 = vperm.slane %v698, %v570
      %v750 = vsel %vm572, %v749, %v748
      %v751 = vperm.slane %v701, %v568
      %v752 = vperm.slane %v704, %v570
      %v753 = vsel %vm572, %v752, %v751
      %v754 = vperm.slane %v707, %v568
      %v755 = vperm.slane %v710, %v570
      %v756 = vsel %vm572, %v755, %v754
      %v757 = vperm.slane %v713, %v568
      %v758 = vperm.slane %v716, %v570
      %v759 = vsel %vm572, %v758, %v757
      %v760 = vperm.slane %v719, %v568
      %v761 = vperm.slane %v722, %v570
      %v762 = vsel %vm572, %v761, %v760
      %v763 = vsel %vm595, %v744, %v741
      %v764 = vsel %vm597, %v747, %v763
      %v765 = vsel %vm599, %v750, %v764
      %v766 = vsel %vm601, %v753, %v765
      %v767 = vsel %vm603, %v756, %v766
      %v768 = vsel %vm605, %v759, %v767
      %v769 = vsel %vm607, %v762, %v768
      %v771 = vsel %vm501, %v769, -1e+30
      %772 = vrot.lane.b32.xlu0 %v485, 64
      %v773 = vpop.permute.xlu0 %772
      %774 = vrot.lane.b32.xlu0 %v486, 64
      %v775 = vpop.permute.xlu0 %774
      %776 = vrot.lane.b32.xlu0 %v487, 64
      %v777 = vpop.permute.xlu0 %776
      %778 = vrot.lane.b32.xlu0 %v488, 64
      %v779 = vpop.permute.xlu0 %778
      %780 = vrot.lane.b32.xlu0 %v489, 64
      %v781 = vpop.permute.xlu0 %780
      %782 = vrot.lane.b32.xlu0 %v490, 64
      %v783 = vpop.permute.xlu0 %782
      %784 = vrot.lane.b32.xlu0 %v491, 64
      %v785 = vpop.permute.xlu0 %784
      %786 = vrot.lane.b32.xlu0 %v492, 64
      %v787 = vpop.permute.xlu0 %786
      %788 = vrot.lane.b32.xlu0 %v493, 64
      %v789 = vpop.permute.xlu0 %788
      %790 = vrot.lane.b32.xlu0 %v494, 64
      %v791 = vpop.permute.xlu0 %790
      %792 = vrot.lane.b32.xlu0 %v495, 64
      %v793 = vpop.permute.xlu0 %792
      %794 = vrot.lane.b32.xlu0 %v496, 64
      %v795 = vpop.permute.xlu0 %794
      %796 = vrot.lane.b32.xlu0 %v497, 64
      %v797 = vpop.permute.xlu0 %796
      %798 = vrot.lane.b32.xlu0 %v498, 64
      %v799 = vpop.permute.xlu0 %798
      %800 = vrot.lane.b32.xlu0 %v499, 64
      %v801 = vpop.permute.xlu0 %800
      %802 = vrot.lane.b32.xlu0 %v500, 64
      %v803 = vpop.permute.xlu0 %802
      %v820 = vsel %vm502, %v773, 0.0
      %821 = vadd.xlane.f32.xlu0 %v820
      %v822 = vpop.xlane.xlu0 %821
      %v823 = vsel %vm502, %v775, 0.0
      %824 = vadd.xlane.f32.xlu0 %v823
      %v825 = vpop.xlane.xlu0 %824
      %v826 = vsel %vm502, %v777, 0.0
      %827 = vadd.xlane.f32.xlu0 %v826
      %v828 = vpop.xlane.xlu0 %827
      %v829 = vsel %vm502, %v779, 0.0
      %830 = vadd.xlane.f32.xlu0 %v829
      %v831 = vpop.xlane.xlu0 %830
      %v832 = vsel %vm502, %v781, 0.0
      %833 = vadd.xlane.f32.xlu0 %v832
      %v834 = vpop.xlane.xlu0 %833
      %v835 = vsel %vm502, %v783, 0.0
      %836 = vadd.xlane.f32.xlu0 %v835
      %v837 = vpop.xlane.xlu0 %836
      %v838 = vsel %vm502, %v785, 0.0
      %839 = vadd.xlane.f32.xlu0 %v838
      %v840 = vpop.xlane.xlu0 %839
      %v841 = vsel %vm502, %v787, 0.0
      %842 = vadd.xlane.f32.xlu0 %v841
      %v843 = vpop.xlane.xlu0 %842
      %v844 = vsel %vm502, %v789, 0.0
      %845 = vadd.xlane.f32.xlu0 %v844
      %v846 = vpop.xlane.xlu0 %845
      %v847 = vsel %vm502, %v791, 0.0
      %848 = vadd.xlane.f32.xlu0 %v847
      %v849 = vpop.xlane.xlu0 %848
      %v850 = vsel %vm502, %v793, 0.0
      %851 = vadd.xlane.f32.xlu0 %v850
      %v852 = vpop.xlane.xlu0 %851
      %v853 = vsel %vm502, %v795, 0.0
      %854 = vadd.xlane.f32.xlu0 %v853
      %v855 = vpop.xlane.xlu0 %854
      %v856 = vsel %vm502, %v797, 0.0
      %857 = vadd.xlane.f32.xlu0 %v856
      %v858 = vpop.xlane.xlu0 %857
      %v859 = vsel %vm502, %v799, 0.0
      %860 = vadd.xlane.f32.xlu0 %v859
      %v861 = vpop.xlane.xlu0 %860
      %v862 = vsel %vm502, %v801, 0.0
      %863 = vadd.xlane.f32.xlu0 %v862
      %v864 = vpop.xlane.xlu0 %863
      %v865 = vsel %vm502, %v803, 0.0
      %866 = vadd.xlane.f32.xlu0 %v865
      %v867 = vpop.xlane.xlu0 %866
      %v884 = vperm.slane %v822, %v568
      %v885 = vperm.slane %v825, %v570
      %v886 = vsel %vm572, %v885, %v884
      %v887 = vperm.slane %v828, %v568
      %v888 = vperm.slane %v831, %v570
      %v889 = vsel %vm572, %v888, %v887
      %v890 = vperm.slane %v834, %v568
      %v891 = vperm.slane %v837, %v570
      %v892 = vsel %vm572, %v891, %v890
      %v893 = vperm.slane %v840, %v568
      %v894 = vperm.slane %v843, %v570
      %v895 = vsel %vm572, %v894, %v893
      %v896 = vperm.slane %v846, %v568
      %v897 = vperm.slane %v849, %v570
      %v898 = vsel %vm572, %v897, %v896
      %v899 = vperm.slane %v852, %v568
      %v900 = vperm.slane %v855, %v570
      %v901 = vsel %vm572, %v900, %v899
      %v902 = vperm.slane %v858, %v568
      %v903 = vperm.slane %v861, %v570
      %v904 = vsel %vm572, %v903, %v902
      %v905 = vperm.slane %v864, %v568
      %v906 = vperm.slane %v867, %v570
      %v907 = vsel %vm572, %v906, %v905
      %v908 = vsel %vm595, %v889, %v886
      %v909 = vsel %vm597, %v892, %v908
      %v910 = vsel %vm599, %v895, %v909
      %v911 = vsel %vm601, %v898, %v910
      %v912 = vsel %vm603, %v901, %v911
      %v913 = vsel %vm605, %v904, %v912
      %v914 = vsel %vm607, %v907, %v913
      %v916 = vsel %vm501, %v914, -1e+30
      %917 = vrot.lane.b32.xlu0 %v485, 32
      %v918 = vpop.permute.xlu0 %917
      %919 = vrot.lane.b32.xlu0 %v486, 32
      %v920 = vpop.permute.xlu0 %919
      %921 = vrot.lane.b32.xlu0 %v487, 32
      %v922 = vpop.permute.xlu0 %921
      %923 = vrot.lane.b32.xlu0 %v488, 32
      %v924 = vpop.permute.xlu0 %923
      %925 = vrot.lane.b32.xlu0 %v489, 32
      %v926 = vpop.permute.xlu0 %925
      %927 = vrot.lane.b32.xlu0 %v490, 32
      %v928 = vpop.permute.xlu0 %927
      %929 = vrot.lane.b32.xlu0 %v491, 32
      %v930 = vpop.permute.xlu0 %929
      %931 = vrot.lane.b32.xlu0 %v492, 32
      %v932 = vpop.permute.xlu0 %931
      %933 = vrot.lane.b32.xlu0 %v493, 32
      %v934 = vpop.permute.xlu0 %933
      %935 = vrot.lane.b32.xlu0 %v494, 32
      %v936 = vpop.permute.xlu0 %935
      %937 = vrot.lane.b32.xlu0 %v495, 32
      %v938 = vpop.permute.xlu0 %937
      %939 = vrot.lane.b32.xlu0 %v496, 32
      %v940 = vpop.permute.xlu0 %939
      %941 = vrot.lane.b32.xlu0 %v497, 32
      %v942 = vpop.permute.xlu0 %941
      %943 = vrot.lane.b32.xlu0 %v498, 32
      %v944 = vpop.permute.xlu0 %943
      %945 = vrot.lane.b32.xlu0 %v499, 32
      %v946 = vpop.permute.xlu0 %945
      %947 = vrot.lane.b32.xlu0 %v500, 32
      %v948 = vpop.permute.xlu0 %947
      %v965 = vsel %vm502, %v918, 0.0
      %966 = vadd.xlane.f32.xlu0 %v965
      %v967 = vpop.xlane.xlu0 %966
      %v968 = vsel %vm502, %v920, 0.0
      %969 = vadd.xlane.f32.xlu0 %v968
      %v970 = vpop.xlane.xlu0 %969
      %v971 = vsel %vm502, %v922, 0.0
      %972 = vadd.xlane.f32.xlu0 %v971
      %v973 = vpop.xlane.xlu0 %972
      %v974 = vsel %vm502, %v924, 0.0
      %975 = vadd.xlane.f32.xlu0 %v974
      %v976 = vpop.xlane.xlu0 %975
      %v977 = vsel %vm502, %v926, 0.0
      %978 = vadd.xlane.f32.xlu0 %v977
      %v979 = vpop.xlane.xlu0 %978
      %v980 = vsel %vm502, %v928, 0.0
      %981 = vadd.xlane.f32.xlu0 %v980
      %v982 = vpop.xlane.xlu0 %981
      %v983 = vsel %vm502, %v930, 0.0
      %984 = vadd.xlane.f32.xlu0 %v983
      %v985 = vpop.xlane.xlu0 %984
      %v986 = vsel %vm502, %v932, 0.0
      %987 = vadd.xlane.f32.xlu0 %v986
      %v988 = vpop.xlane.xlu0 %987
      %v989 = vsel %vm502, %v934, 0.0
      %990 = vadd.xlane.f32.xlu0 %v989
      %v991 = vpop.xlane.xlu0 %990
      %v992 = vsel %vm502, %v936, 0.0
      %993 = vadd.xlane.f32.xlu0 %v992
      %v994 = vpop.xlane.xlu0 %993
      %v995 = vsel %vm502, %v938, 0.0
      %996 = vadd.xlane.f32.xlu0 %v995
      %v997 = vpop.xlane.xlu0 %996
      %v998 = vsel %vm502, %v940, 0.0
      %999 = vadd.xlane.f32.xlu0 %v998
      %v1000 = vpop.xlane.xlu0 %999
      %v1001 = vsel %vm502, %v942, 0.0
      %1002 = vadd.xlane.f32.xlu0 %v1001
      %v1003 = vpop.xlane.xlu0 %1002
      %v1004 = vsel %vm502, %v944, 0.0
      %1005 = vadd.xlane.f32.xlu0 %v1004
      %v1006 = vpop.xlane.xlu0 %1005
      %v1007 = vsel %vm502, %v946, 0.0
      %1008 = vadd.xlane.f32.xlu0 %v1007
      %v1009 = vpop.xlane.xlu0 %1008
      %v1010 = vsel %vm502, %v948, 0.0
      %1011 = vadd.xlane.f32.xlu0 %v1010
      %v1012 = vpop.xlane.xlu0 %1011
      %v1029 = vperm.slane %v967, %v568
      %v1030 = vperm.slane %v970, %v570
      %v1031 = vsel %vm572, %v1030, %v1029
      %v1032 = vperm.slane %v973, %v568
      %v1033 = vperm.slane %v976, %v570
      %v1034 = vsel %vm572, %v1033, %v1032
      %v1035 = vperm.slane %v979, %v568
      %v1036 = vperm.slane %v982, %v570
      %v1037 = vsel %vm572, %v1036, %v1035
      %v1038 = vperm.slane %v985, %v568
      %v1039 = vperm.slane %v988, %v570
      %v1040 = vsel %vm572, %v1039, %v1038
      %v1041 = vperm.slane %v991, %v568
      %v1042 = vperm.slane %v994, %v570
      %v1043 = vsel %vm572, %v1042, %v1041
      %v1044 = vperm.slane %v997, %v568
      %v1045 = vperm.slane %v1000, %v570
      %v1046 = vsel %vm572, %v1045, %v1044
      %v1047 = vperm.slane %v1003, %v568
      %v1048 = vperm.slane %v1006, %v570
      %v1049 = vsel %vm572, %v1048, %v1047
      %v1050 = vperm.slane %v1009, %v568
      %v1051 = vperm.slane %v1012, %v570
      %v1052 = vsel %vm572, %v1051, %v1050
      %v1053 = vsel %vm595, %v1034, %v1031
      %v1054 = vsel %vm597, %v1037, %v1053
      %v1055 = vsel %vm599, %v1040, %v1054
      %v1056 = vsel %vm601, %v1043, %v1055
      %v1057 = vsel %vm603, %v1046, %v1056
      %v1058 = vsel %vm605, %v1049, %v1057
      %v1059 = vsel %vm607, %v1052, %v1058
      %v1061 = vsel %vm501, %v1059, -1e+30
      %v1062 = vld [vmem:[#allocation2] sm:$0xff]
      %v1063 = vld [vmem:[#allocation2 + $0x8] sm:$0xff]
      %v1064 = vld [vmem:[#allocation2 + $0x10] sm:$0xff]
      %v1065 = vld [vmem:[#allocation2 + $0x18] sm:$0xff]
      %vm1066 = vcmask 130048
      %v1067 = vsel %vm1066, %v610, -inf
      %1068 = vmax.xlane.f32.xlu0 %v1067
      %v1069 = vpop.xlane.xlu0 %1068
      %v1070 = vsel %vm1066, %v771, -inf
      %1071 = vmax.xlane.f32.xlu0 %v1070
      %v1072 = vpop.xlane.xlu0 %1071
      %v1073 = vsel %vm1066, %v916, -inf
      %1074 = vmax.xlane.f32.xlu0 %v1073
      %v1075 = vpop.xlane.xlu0 %1074
      %v1076 = vsel %vm1066, %v1061, -inf
      %1077 = vmax.xlane.f32.xlu0 %v1076
      %v1078 = vpop.xlane.xlu0 %1077
      %v1079 = vmax.f32 %v1062, %v1069
      %v1080 = vmax.f32 %v1063, %v1072
      %v1081 = vmax.f32 %v1064, %v1075
      %v1082 = vmax.f32 %v1065, %v1078
      %v1083 = vsub.f32 %v1062, %v1079
      %v1084 = vsub.f32 %v1063, %v1080
      %v1085 = vsub.f32 %v1064, %v1081
      %v1086 = vsub.f32 %v1065, %v1082
      %v1087 = vmul.f32 %v1083, 1.442695
      %v1088 = vpow.pop %v1087
      %v1089 = vmul.f32 %v1084, 1.442695
      %v1090 = vpow.pop %v1089
      %v1091 = vmul.f32 %v1085, 1.442695
      %v1092 = vpow.pop %v1091
      %v1093 = vmul.f32 %v1086, 1.442695
      %v1094 = vpow.pop %v1093
      %vm1095 = vcmp.gt.f32.partialorder %v610, -5e+29
      %vm1096 = vcmp.gt.f32.partialorder %v771, -5e+29
      %vm1097 = vcmp.gt.f32.partialorder %v916, -5e+29
      %vm1098 = vcmp.gt.f32.partialorder %v1061, -5e+29
      %1100 = vset.pattern.permute.xlu0 0
      %1101 = vperm.xlu0 %1100, %v1079
      %v1102 = vpop.permute.xlu0 %1101
      %1105 = vset.pattern.permute.xlu0 0
      %1106 = vperm.xlu0 %1105, %v1080
      %v1107 = vpop.permute.xlu0 %1106
      %1110 = vset.pattern.permute.xlu0 0
      %1111 = vperm.xlu0 %1110, %v1081
      %v1112 = vpop.permute.xlu0 %1111
      %1115 = vset.pattern.permute.xlu0 0
      %1116 = vperm.xlu0 %1115, %v1082
      %v1117 = vpop.permute.xlu0 %1116
      %v1119 = vsub.f32 %v610, %v1102
      %v1120 = vsub.f32 %v771, %v1107
      %v1121 = vsub.f32 %v916, %v1112
      %v1122 = vsub.f32 %v1061, %v1117
      %v1123 = vmul.f32 %v1119, 1.442695
      %v1124 = vpow.pop %v1123
      %v1125 = vmul.f32 %v1120, 1.442695
      %v1126 = vpow.pop %v1125
      %v1127 = vmul.f32 %v1121, 1.442695
      %v1128 = vpow.pop %v1127
      %v1129 = vmul.f32 %v1122, 1.442695
      %v1130 = vpow.pop %v1129
      %v1131 = vsel %vm1095, %v1124, 0.0
      %v1132 = vsel %vm1096, %v1126, 0.0
      %v1133 = vsel %vm1097, %v1128, 0.0
      %v1134 = vsel %vm1098, %v1130, 0.0
      %v1135 = vld [vmem:[#allocation3] sm:$0xff]
      %v1136 = vld [vmem:[#allocation3 + $0x8] sm:$0xff]
      %v1137 = vld [vmem:[#allocation3 + $0x10] sm:$0xff]
      %v1138 = vld [vmem:[#allocation3 + $0x18] sm:$0xff]
      %v1139 = vmul.f32 %v1088, %v1135
      %v1140 = vmul.f32 %v1090, %v1136
      %v1141 = vmul.f32 %v1092, %v1137
      %v1142 = vmul.f32 %v1094, %v1138
      %v1143 = vsel %vm1066, %v1131, 0.0
      %1144 = vadd.xlane.f32.xlu0 %v1143
      %v1145 = vpop.xlane.xlu0 %1144
      %v1146 = vsel %vm1066, %v1132, 0.0
      %1147 = vadd.xlane.f32.xlu0 %v1146
      %v1148 = vpop.xlane.xlu0 %1147
      %v1149 = vsel %vm1066, %v1133, 0.0
      %1150 = vadd.xlane.f32.xlu0 %v1149
      %v1151 = vpop.xlane.xlu0 %1150
      %v1152 = vsel %vm1066, %v1134, 0.0
      %1153 = vadd.xlane.f32.xlu0 %v1152
      %v1154 = vpop.xlane.xlu0 %1153
      %v1155 = vadd.f32 %v1139, %v1145
      %v1156 = vadd.f32 %v1140, %v1148
      %v1157 = vadd.f32 %v1141, %v1151
      %v1158 = vadd.f32 %v1142, %v1154
      %vm1159 = vcmask 7168
      %1160 = vst.msk [vmem:[#allocation3] sm:$0xff] %vm1159, %v1155
      %1161 = vst.msk [vmem:[#allocation3 + $0x8] sm:$0xff] %vm1159, %v1156
      %1162 = vst.msk [vmem:[#allocation3 + $0x10] sm:$0xff] %vm1159, %v1157
      %1163 = vst.msk [vmem:[#allocation3 + $0x18] sm:$0xff] %vm1159, %v1158
      %v1164 = vld [vmem:[#allocation4] sm:$0xff]
      %v1165 = vld [vmem:[#allocation4 + $0x8] sm:$0xff]
      %v1166 = vld [vmem:[#allocation4 + $0x10] sm:$0xff]
      %v1167 = vld [vmem:[#allocation4 + $0x18] sm:$0xff]
      %1169 = vset.pattern.permute.xlu0 0
      %1170 = vperm.xlu0 %1169, %v1088
      %v1171 = vpop.permute.xlu0 %1170
      %1174 = vset.pattern.permute.xlu0 0
      %1175 = vperm.xlu0 %1174, %v1090
      %v1176 = vpop.permute.xlu0 %1175
      %1179 = vset.pattern.permute.xlu0 0
      %1180 = vperm.xlu0 %1179, %v1092
      %v1181 = vpop.permute.xlu0 %1180
      %1184 = vset.pattern.permute.xlu0 0
      %1185 = vperm.xlu0 %1184, %v1094
      %v1186 = vpop.permute.xlu0 %1185
      %v1188 = vmul.f32 %v1171, %v1164
      %v1189 = vmul.f32 %v1176, %v1165
      %v1190 = vmul.f32 %v1181, %v1166
      %v1191 = vmul.f32 %v1186, %v1167
      %v1192 = vpack.c.bf16 %v1132, %v1131
      %v1193 = vpack.c.bf16 %v1134, %v1133
      %v1194 = vpack.c.bf16 %v343, %v342
      %v1196 = vsel %vm1066, %v1192, 0
      %v1199 = vsel %vm1066, %v1193, 0
      %1201 = vmatpush.bf16.msra.mxu0 0
      %1202 = vmatpush.bf16.msra.mxu0 0
      %1203 = vmatpush.bf16.msra.mxu0 0
      %1204 = vmatpush.bf16.msra.mxu0 0
      %1205 = vmatpush.bf16.msra.mxu0 0
      %1206 = vmatpush.bf16.msra.mxu0 0
      %1207 = vmatpush.bf16.msra.mxu0 0
      %1208 = vmatpush.bf16.msra.mxu0 %v1194
      %1209 = vmatmul.bf16.gmra.mxu0 %v1196
      %v1210 = vpop.f32.mrf.mxu0
      %v1211 = vadd.f32 0.0, %v1210
      %v1212 = vpop.f32.mrf.mxu0
      %v1213 = vadd.f32 0.0, %v1212
      %1214 = vmatmul.bf16.gmra.mxu0 %v1199
      %v1215 = vpop.f32.mrf.mxu0
      %v1216 = vadd.f32 0.0, %v1215
      %v1217 = vpop.f32.mrf.mxu0
      %v1218 = vadd.f32 0.0, %v1217
      %1219 = vdwg.mxu0
      %v1220 = vadd.f32 %v1188, %v1211
      %v1221 = vadd.f32 %v1189, %v1213
      %v1222 = vadd.f32 %v1190, %v1216
      %v1223 = vadd.f32 %v1191, %v1218
      %1224 = vst [vmem:[#allocation4] sm:$0xff] %v1220
      %1225 = vst [vmem:[#allocation4 + $0x8] sm:$0xff] %v1221
      %1226 = vst [vmem:[#allocation4 + $0x10] sm:$0xff] %v1222
      %1227 = vst [vmem:[#allocation4 + $0x18] sm:$0xff] %v1223
      %1228 = vst.msk [vmem:[#allocation2] sm:$0xff] %vm1159, %v1079
      %1229 = vst.msk [vmem:[#allocation2 + $0x8] sm:$0xff] %vm1159, %v1080
      %1230 = vst.msk [vmem:[#allocation2 + $0x10] sm:$0xff] %vm1159, %v1081
      %1231 = vst.msk [vmem:[#allocation2 + $0x18] sm:$0xff] %vm1159, %v1082
      // Predicated region
      $region45: #{gatv2_layer.4} parent=39 // pred_check
        %p1232 = pneg %p324
      $region46: #{gatv2_layer.4} parent=39 // pred_check_branch
        %1234 = sbr.rel (%p1232) target = $region48
      $region47: #{gatv2_layer.4} parent=39 // pred_region
        %v1235 = vld [vmem:[#allocation3] sm:$0xff]
        %v1236 = vld [vmem:[#allocation3 + $0x8] sm:$0xff]
        %v1237 = vld [vmem:[#allocation3 + $0x10] sm:$0xff]
        %v1238 = vld [vmem:[#allocation3 + $0x18] sm:$0xff]
        %v1239 = vmax.f32 %v1235, 1e-20
        %v1240 = vmax.f32 %v1236, 1e-20
        %v1241 = vmax.f32 %v1237, 1e-20
        %v1242 = vmax.f32 %v1238, 1e-20
        %v1243 = vrcp.pop %v1239
        %v1244 = vrcp.pop %v1240
        %v1245 = vrcp.pop %v1241
        %v1246 = vrcp.pop %v1242
        %v1247 = vld [vmem:[#allocation4] sm:$0xff]
        %v1248 = vld [vmem:[#allocation4 + $0x8] sm:$0xff]
        %v1249 = vld [vmem:[#allocation4 + $0x10] sm:$0xff]
        %v1250 = vld [vmem:[#allocation4 + $0x18] sm:$0xff]
        %1252 = vset.pattern.permute.xlu0 0
        %1253 = vperm.xlu0 %1252, %v1243
        %v1254 = vpop.permute.xlu0 %1253
        %1257 = vset.pattern.permute.xlu0 0
        %1258 = vperm.xlu0 %1257, %v1244
        %v1259 = vpop.permute.xlu0 %1258
        %1262 = vset.pattern.permute.xlu0 0
        %1263 = vperm.xlu0 %1262, %v1245
        %v1264 = vpop.permute.xlu0 %1263
        %1267 = vset.pattern.permute.xlu0 0
        %1268 = vperm.xlu0 %1267, %v1246
        %v1269 = vpop.permute.xlu0 %1268
        %v1271 = vmul.f32 %v1247, %v1254
        %v1272 = vmul.f32 %v1248, %v1259
        %v1273 = vmul.f32 %v1249, %v1264
        %v1274 = vmul.f32 %v1250, %v1269
        %vm1275 = vcmp.ge.s32.totalorder %v568, 0
        %vm1276 = vcmp.lt.s32.totalorder %v568, 32
        %vm1277 = vmand %vm1275, %vm1276
        %v1278 = vsel %vm1277, %v1271, 0.0
        %v1279 = vadd.f32 %v1278, 0.0
        %vm1280 = vcmp.ge.s32.totalorder %v568, 32
        %vm1281 = vcmp.lt.s32.totalorder %v568, 64
        %vm1282 = vmand %vm1280, %vm1281
        %v1283 = vsel %vm1282, %v1272, 0.0
        %v1284 = vadd.f32 %v1279, %v1283
        %vm1285 = vcmp.ge.s32.totalorder %v568, 64
        %vm1286 = vcmp.lt.s32.totalorder %v568, 96
        %vm1287 = vmand %vm1285, %vm1286
        %v1288 = vsel %vm1287, %v1273, 0.0
        %v1289 = vadd.f32 %v1284, %v1288
        %vm1290 = vcmp.ge.s32.totalorder %v568, 96
        %vm1291 = vcmp.lt.s32.totalorder %v568, 128
        %vm1292 = vmand %vm1290, %vm1291
        %v1293 = vsel %vm1292, %v1274, 0.0
        %v1294 = vadd.f32 %v1289, %v1293
        %1295 = vst [vmem:[%s322] sm:$0xff] %v1294
      $region48: #{gatv2_layer.4} parent=39 // pred_fallthru
        _
      %p1296 = scmp.lt.s32.totalorder %s20, 1
      %s1297 = scalar_select %p1296, %s20, 1
      %s1298 = smul.addr %s1297, 8
      %s1299 = scalar_lea.vmem %s5, %s1298
      // Predicated region
      $region49: #{gatv2_layer.4} parent=39 // pred_check
        %p1300 = pneg %p175
      $region50: #{gatv2_layer.4} parent=39 // pred_check_branch
        %1302 = sbr.rel (%p1300) target = $region52
      $region51: #{gatv2_layer.4} parent=39 // pred_region
        _
      $region52: #{gatv2_layer.4} parent=39 // pred_fallthru
        _
    $region40: #{gatv2_layer.4} parent=5 // pred_fallthru
      _
    %p1303 = scmp.le.s32.totalorder 2, %s11
    // Predicated region
    $region53: #{gatv2_layer.4} parent=5 // pred_check
      %p1304 = pneg %p1303
    $region54: #{gatv2_layer.4} parent=5 // pred_check_branch
      %1306 = sbr.rel (%p1304) target = $region56
    $region55: #{gatv2_layer.4} parent=5 // pred_region
      %s1307 = ssub.s32 %s11, 2
      // Predicated region
      $region57: #{gatv2_layer.4} parent=55 // pred_check
        %p1308 = pneg %p181
      $region58: #{gatv2_layer.4} parent=55 // pred_check_branch
        %1310 = sbr.rel (%p1308) target = $region60
      $region59: #{gatv2_layer.4} parent=55 // pred_region
        %p1311 = scmp.lt.s32.totalorder %s22, 1
        %s1312 = scalar_select %p1311, %s22, 1
        %s1313 = smul.addr %s1312, 8
        %s1314 = scalar_lea.vmem %s5, %s1313
      $region60: #{gatv2_layer.4} parent=55 // pred_fallthru
        _
    $region56: #{gatv2_layer.4} parent=5 // pred_fallthru
      _
  $region6: #{gatv2_layer.4} parent=0 // loop_footer
    %s15 = sadd.s32 1, %s11
  $region7: #{gatv2_layer.4} parent=0 // loop_footer_branch
    %10 = sbr.rel target = $region3
  $region8: #{gatv2_layer.4} parent=0 // loop_exit
    _

</llo_original>
